<compile_context>
chip_gen: v6e
topology: v6e:2x2x1
jax: 0.10.0
libtpu: 0.0.40
codegen_flags: <defaults>
</compile_context>

<pallas_src>
import functools
import math

import jax
import jax.numpy as jnp
from jax.experimental import pallas as pl
from jax.experimental.pallas import tpu as pltpu


# ----------------------------- in-kernel helpers -----------------------------

def _layernorm(x, g, b, eps=1e-5):
    # LayerNorm over the last (channel) dim, biased variance (PyTorch semantics).
    mean = jnp.mean(x, axis=-1, keepdims=True)
    xc = x - mean
    var = jnp.mean(xc * xc, axis=-1, keepdims=True)
    return xc * jax.lax.rsqrt(var + eps) * g + b


def _layernorm_noaffine(x, eps=1e-5):
    # Affine (gamma/beta) is folded into the following matmul by the wrapper.
    mean = jnp.mean(x, axis=-1, keepdims=True)
    xc = x - mean
    var = jnp.mean(xc * xc, axis=-1, keepdims=True)
    return xc * jax.lax.rsqrt(var + eps)


def _gelu(x):
    # TODO(synk): PyTorch F.gelu default is the exact erf-based GELU; erf has no
    # reliable Mosaic lowering, so we use the tanh approximation (abs err ~1e-3).
    c = math.sqrt(2.0 / math.pi)
    return 0.5 * x * (1.0 + jnp.tanh(c * (x + 0.044715 * x * x * x)))


# --------------------------------- the kernel --------------------------------

def wavenext_kernel(
    x_ref,                       # (1, T, 7*Cin) bf16  im2col'd input (used at l == 0)
    in_w_ref, in_b_ref,          # (7*Cin, C) bf16, (1, C) f32
    n1g_ref, n1b_ref,            # (1, C), (1, C)
    dw_w_ref, dw_b_ref,          # (1, 7, C), (1, 1, C)    -- current layer only
    pw1w_ref, pw1b_ref,          # (1, C, H) bf16, (1, 1, H)   (LN affine folded in)
    pw2w_ref, pw2b_ref,          # (1, H, C) bf16, (1, 1, C)   (layer scale folded in)
    headw_ref, headb_ref,        # (C, hop_p) bf16, (1, hop_p) fused norm@out_conv@fc
    o_ref,                       # (1, T, hop_p) f32
    x_acc,                       # VMEM (T, C) f32  running activation (persists over l)
    h_buf,                       # VMEM (T, C) f32  post-depthwise/LN buffer
    *, num_layers, seq_len, t_chunk, apply_tanh,
):
    l = pl.program_id(1)
    T = seq_len

    # ---- stage 0 (l == 0): in_conv (k=7 as one im2col matmul) + LayerNorm ----
    @pl.when(l == 0)
    def _():
        y = jnp.dot(x_ref[0], in_w_ref[...],
                    preferred_element_type=jnp.float32) + in_b_ref[...]
        x_acc[...] = _layernorm(y, n1g_ref[...], n1b_ref[...])

    # ---- ConvNeXt layer l ----------------------------------------------------
    x = x_acc[...]                                       # (T, C) f32 residual
    dw = dw_w_ref[0]                                     # (7, C) depthwise taps
    t_idx = jax.lax.broadcasted_iota(jnp.int32, (T, 1), 0)

    # depthwise conv k=7, pad=3: h[t] = sum_k x[t + k - 3] * w[k]
    # shifted copies via XLU roll (rolled[t] = x[t - shift], shift = 3 - k) + edge masks.
    h = x * dw[3:4, :]                                   # center tap, no shift
    for k in range(7):
        if k == 3:
            continue
        shift = 3 - k
        rolled = pltpu.roll(x, shift=shift % T, axis=0)
        valid = (t_idx >= shift) & (t_idx < T + shift)   # zero-padding at the edges
        h = h + jnp.where(valid, rolled, 0.0) * dw[k:k + 1, :]
    h = h + dw_b_ref[0]
    h_buf[...] = _layernorm_noaffine(h)                  # gamma/beta folded into pw1

    # pointwise MLP, tiled over T: never materialize the full (T, H) hidden.
    for t0 in range(0, T, t_chunk):
        tc = min(t_chunk, T - t0)
        hb = h_buf[t0:t0 + tc, :]
        z = jnp.dot(hb.astype(jnp.bfloat16), pw1w_ref[0],
                    preferred_element_type=jnp.float32) + pw1b_ref[0]
        z = _gelu(z)
        z = jnp.dot(z.astype(jnp.bfloat16), pw2w_ref[0],
                    preferred_element_type=jnp.float32) + pw2b_ref[0]
        x_acc[t0:t0 + tc, :] = x_acc[t0:t0 + tc, :] + z  # layer scale folded into pw2

    # ---- last layer: final LayerNorm + fused (norm_last @ out_conv @ fc) head ----
    @pl.when(l == num_layers - 1)
    def _():
        for t0 in range(0, T, t_chunk):
            tc = min(t_chunk, T - t0)
            xn = _layernorm_noaffine(x_acc[t0:t0 + tc, :])
            o = jnp.dot(xn.astype(jnp.bfloat16), headw_ref[...],
                        preferred_element_type=jnp.float32) + headb_ref[...]
            if apply_tanh:
                o = jnp.tanh(o)
            o_ref[0, t0:t0 + tc, :] = o.astype(o_ref.dtype)


# --------------------------------- wrapper -----------------------------------

def wavenext_apply(x_ncl, params, *, num_layers, apply_tanh=True):
    """x_ncl: (B, in_channels, T) like the PyTorch module. Returns (B, 1, hop*T)."""
    B, cin, T = x_ncl.shape
    C = params["in_b"].shape[-1]
    hop = params["fc_b"].shape[-1]
    hop_p = ((hop + 127) // 128) * 128           # lane-dense output, slice afterwards
    t_chunk = T if T <= 512 else 512             # MLP T-tile (multiple of 8 when tiling)

    # channel-last + im2col for the k=7 input conv (done once, in XLA).
    x_btc = jnp.transpose(x_ncl, (0, 2, 1)).astype(jnp.float32)        # (B, T, Cin)
    xpad = jnp.pad(x_btc, ((0, 0), (3, 3), (0, 0)))
    x_im2col = jnp.concatenate([xpad[:, k:k + T, :] for k in range(7)],
                               axis=-1).astype(jnp.bfloat16)           # (B, T, 7*Cin)

    # ---- constant folding (all exact, done once in f32 in XLA) ----------------
    in_w = params["in_w"].reshape(7 * cin, C).astype(jnp.bfloat16)

    # fold per-layer LayerNorm affine into pw1:  (xhat*g + b) @ W1 + b1
    #   = xhat @ (g (x) W1) + (b @ W1 + b1)
    ln_g_col = jnp.swapaxes(params["ln_g"], 1, 2)                      # (L, C, 1)
    pw1_w = (ln_g_col * params["pw1_w"]).astype(jnp.bfloat16)          # (L, C, H)
    pw1_b = jnp.matmul(params["ln_b"], params["pw1_w"]) + params["pw1_b"]   # (L, 1, H)

    # fold layer-scale into pw2:  (h @ W2 + b2) * s = h @ (W2*s) + b2*s
    pw2_w = (params["pw2_w"] * params["scale"]).astype(jnp.bfloat16)   # (L, H, C)
    pw2_b = params["pw2_b"] * params["scale"]                          # (L, 1, C)

    # fuse out_conv @ fc (both 1x1, no nonlinearity between) and fold norm_last
    # affine into the fused head; pad hop up to a lane-dense multiple of 128.
    head_w32 = params["out_w"] @ params["fc_w"]                        # (C, hop) f32
    head_b32 = params["out_b"] @ params["fc_w"] + params["fc_b"]       # (1, hop) f32
    head_b32 = params["n2_b"] @ head_w32 + head_b32                    # beta fold
    head_w32 = params["n2_g"].T * head_w32                             # gamma fold
    head_w = jnp.pad(head_w32, ((0, 0), (0, hop_p - hop))).astype(jnp.bfloat16)
    head_b = jnp.pad(head_b32, ((0, 0), (0, hop_p - hop)))

    operands = [
        x_im2col,
        in_w, params["in_b"],
        params["n1_g"], params["n1_b"],
        params["dw_w"], params["dw_b"],
        pw1_w, pw1_b,
        pw2_w, pw2_b,
        head_w, head_b,
    ]

    def resident(a):      # full array, fetched once, stays resident in VMEM
        nd = a.ndim
        return pl.BlockSpec(a.shape, lambda b, l, _nd=nd: (0,) * _nd)

    def per_layer(a):     # (L, ...) -> stream one layer's slice per grid step
        nd = a.ndim
        return pl.BlockSpec((1,) + a.shape[1:],
                            lambda b, l, _nd=nd: (l,) + (0,) * (_nd - 1))

    in_specs = [pl.BlockSpec((1, T, 7 * cin), lambda b, l: (b, 0, 0))] + [
        resident(in_w), resident(params["in_b"]),
        resident(params["n1_g"]), resident(params["n1_b"]),
        per_layer(params["dw_w"]), per_layer(params["dw_b"]),
        per_layer(pw1_w), per_layer(pw1_b),
        per_layer(pw2_w), per_layer(pw2_b),
        resident(head_w), resident(head_b),
    ]

    kernel = functools.partial(
        wavenext_kernel, num_layers=num_layers, seq_len=T,
        t_chunk=t_chunk, apply_tanh=apply_tanh)

    y = pl.pallas_call(
        kernel,
        out_shape=jax.ShapeDtypeStruct((B, T, hop_p), jnp.float32),
        grid=(B, num_layers),
        in_specs=in_specs,
        out_specs=pl.BlockSpec((1, T, hop_p), lambda b, l: (b, 0, 0)),
        scratch_shapes=[pltpu.VMEM((T, C), jnp.float32),
                        pltpu.VMEM((T, C), jnp.float32)],
        compiler_params=pltpu.CompilerParams(
            dimension_semantics=("parallel", "arbitrary"),
            vmem_limit_bytes=48 * 1024 * 1024),
    )(*operands)                                                       # (B, T, hop_p)

    # PyTorch: o is (B, hop, T) then reshape(B, 1, -1)  -> hop-major flattening.
    o = jnp.transpose(y[:, :, :hop], (0, 2, 1)).reshape(B, 1, hop * T)
    return o


# ----------------------------- parameter init --------------------------------

def init_params(key, in_channels, channels, h_channels, n_fft, hop_length, num_layers):
    ks = jax.random.split(key, 12)

    def u(k, shape, scale=0.1):
        return jax.random.uniform(k, shape, jnp.float32, -1.0, 1.0) * scale

    p = {}
    # in_conv: torch weight (C, Cin, 7) -> stored as (7, Cin, C)
    p["in_w"] = u(ks[0], (7, in_channels, channels))
    p["in_b"] = u(ks[1], (1, channels))
    p["n1_g"] = jnp.ones((1, channels), jnp.float32)
    p["n1_b"] = jnp.zeros((1, channels), jnp.float32)
    # ConvNeXt layers (stacked over num_layers)
    p["dw_w"] = u(ks[2], (num_layers, 7, channels))          # depthwise taps
    p["dw_b"] = u(ks[3], (num_layers, 1, channels))
    p["ln_g"] = jnp.ones((num_layers, 1, channels), jnp.float32)
    p["ln_b"] = jnp.zeros((num_layers, 1, channels), jnp.float32)
    p["pw1_w"] = u(ks[4], (num_layers, channels, h_channels))
    p["pw1_b"] = u(ks[5], (num_layers, 1, h_channels))
    p["pw2_w"] = u(ks[6], (num_layers, h_channels, channels))
    p["pw2_b"] = u(ks[7], (num_layers, 1, channels))
    p["scale"] = jnp.full((num_layers, 1, channels), 1.0 / num_layers, jnp.float32)
    p["n2_g"] = jnp.ones((1, channels), jnp.float32)
    p["n2_b"] = jnp.zeros((1, channels), jnp.float32)
    # out_conv: torch (n_fft, C, 1) -> (C, n_fft);  fc: torch (hop, n_fft, 1) -> (n_fft, hop)
    p["out_w"] = u(ks[8], (channels, n_fft))
    p["out_b"] = u(ks[9], (1, n_fft))
    p["fc_w"] = u(ks[10], (n_fft, hop_length))
    p["fc_b"] = u(ks[11], (1, hop_length))
    return p


# ------------------------- pure-JAX reference (f32) ---------------------------

def wavenext_reference(x_ncl, params, *, num_layers, apply_tanh=True):
    B, cin, T = x_ncl.shape
    x = jnp.transpose(x_ncl, (0, 2, 1)).astype(jnp.float32)            # (B, T, Cin)

    def ln(v, g, b):
        m = jnp.mean(v, axis=-1, keepdims=True)
        c = v - m
        var = jnp.mean(c * c, axis=-1, keepdims=True)
        return c * jax.lax.rsqrt(var + 1e-5) * g + b

    xpad = jnp.pad(x, ((0, 0), (3, 3), (0, 0)))
    y = sum(jnp.einsum("btc,cd->btd", xpad[:, k:k + T, :], params["in_w"][k])
            for k in range(7)) + params["in_b"][None]
    y = ln(y, params["n1_g"][None], params["n1_b"][None])
    for l in range(num_layers):
        res = y
        ypad = jnp.pad(y, ((0, 0), (3, 3), (0, 0)))
        h = sum(ypad[:, k:k + T, :] * params["dw_w"][l, k][None, None, :]
                for k in range(7)) + params["dw_b"][l][None]
        h = ln(h, params["ln_g"][l][None], params["ln_b"][l][None])
        h = jnp.einsum("btc,ch->bth", h, params["pw1_w"][l]) + params["pw1_b"][l][None]
        h = _gelu(h)
        h = jnp.einsum("bth,hc->btc", h, params["pw2_w"][l]) + params["pw2_b"][l][None]
        y = res + h * params["scale"][l][None]
    y = ln(y, params["n2_g"][None], params["n2_b"][None])
    o = jnp.einsum("btc,cf->btf", y, params["out_w"]) + params["out_b"][None]
    o = jnp.einsum("btf,fh->bth", o, params["fc_w"]) + params["fc_b"][None]
    if apply_tanh:
        o = jnp.tanh(o)
    return jnp.transpose(o, (0, 2, 1)).reshape(B, 1, -1)


# ----------------------------------- main -------------------------------------

if __name__ == "__main__":
    B, in_channels, T = 2, 4, 8
    channels, h_channels = 32, 64
    n_fft, hop_length, num_layers = 16, 4, 2

    key = jax.random.PRNGKey(0)
    kx, kp = jax.random.split(key)
    x = jax.random.normal(kx, (B, in_channels, T), jnp.float32)   # NCL like PyTorch
    params = init_params(kp, in_channels, channels, h_channels,
                         n_fft, hop_length, num_layers)

    out = wavenext_apply(x, params, num_layers=num_layers, apply_tanh=True)
    out = jax.block_until_ready(out)
    assert out.shape == (B, 1, hop_length * T), out.shape
    assert bool(jnp.all(jnp.isfinite(out)))

    # sanity check vs pure-JAX reference (loose tol: bf16 matmul operands in-kernel)
    ref = wavenext_reference(x, params, num_layers=num_layers, apply_tanh=True)
    max_err = float(jnp.max(jnp.abs(out - ref)))
    assert max_err < 5e-2, f"max abs err vs reference: {max_err}"
    print("KERNEL_OK")
</pallas_src>

<mosaic_0001>
module attributes {stable_mosaic.version = 11 : i64} {
  func.func @wavenext_kernel(%arg0: i32, %arg1: i32, %arg2: memref<1x8x28xbf16, #tpu.memory_space<vmem>>, %arg3: memref<28x32xbf16, #tpu.memory_space<vmem>>, %arg4: memref<1x32xf32, #tpu.memory_space<vmem>>, %arg5: memref<1x32xf32, #tpu.memory_space<vmem>>, %arg6: memref<1x32xf32, #tpu.memory_space<vmem>>, %arg7: memref<1x7x32xf32, #tpu.memory_space<vmem>>, %arg8: memref<1x1x32xf32, #tpu.memory_space<vmem>>, %arg9: memref<1x32x64xbf16, #tpu.memory_space<vmem>>, %arg10: memref<1x1x64xf32, #tpu.memory_space<vmem>>, %arg11: memref<1x64x32xbf16, #tpu.memory_space<vmem>>, %arg12: memref<1x1x32xf32, #tpu.memory_space<vmem>>, %arg13: memref<32x128xbf16, #tpu.memory_space<vmem>>, %arg14: memref<1x128xf32, #tpu.memory_space<vmem>>, %arg15: memref<1x8x128xf32, #tpu.memory_space<vmem>>, %arg16: memref<8x32xf32, #tpu.memory_space<vmem>>, %arg17: memref<8x32xf32, #tpu.memory_space<vmem>>) attributes {dimension_semantics = [#tpu.dimension_semantics<parallel>, #tpu.dimension_semantics<arbitrary>], iteration_bounds = array<i64: 2, 2>, scalar_prefetch = 0 : i64, scratch_operands = 2 : i64, tpu.core_type = #tpu.core_type<tc>, window_params = [{transform_indices = @transform_0, window_bounds = array<i64: 1, 8, 28>}, {pipeline_mode = #tpu.pipeline_mode<synchronous>, transform_indices = @transform_1, window_bounds = array<i64: 28, 32>}, {pipeline_mode = #tpu.pipeline_mode<synchronous>, transform_indices = @transform_2, window_bounds = array<i64: 1, 32>}, {pipeline_mode = #tpu.pipeline_mode<synchronous>, transform_indices = @transform_3, window_bounds = array<i64: 1, 32>}, {pipeline_mode = #tpu.pipeline_mode<synchronous>, transform_indices = @transform_4, window_bounds = array<i64: 1, 32>}, {transform_indices = @transform_5, window_bounds = array<i64: 1, 7, 32>}, {transform_indices = @transform_6, window_bounds = array<i64: 1, 1, 32>}, {transform_indices = @transform_7, window_bounds = array<i64: 1, 32, 64>}, {transform_indices = @transform_8, window_bounds = array<i64: 1, 1, 64>}, {transform_indices = @transform_9, window_bounds = array<i64: 1, 64, 32>}, {transform_indices = @transform_10, window_bounds = array<i64: 1, 1, 32>}, {pipeline_mode = #tpu.pipeline_mode<synchronous>, transform_indices = @transform_11, window_bounds = array<i64: 32, 128>}, {pipeline_mode = #tpu.pipeline_mode<synchronous>, transform_indices = @transform_12, window_bounds = array<i64: 1, 128>}, {transform_indices = @transform_13, window_bounds = array<i64: 1, 8, 128>}]} {
    %c0_i32 = arith.constant 0 : i32
    %0 = arith.cmpi eq, %arg1, %c0_i32 : i32
    %1 = arith.extui %0 : i1 to i32
    %c0_i32_0 = arith.constant 0 : i32
    %2 = arith.cmpi ne, %1, %c0_i32_0 : i32
    scf.if %2 {
      %c0_52 = arith.constant 0 : index
      %c0_53 = arith.constant 0 : index
      %c0_54 = arith.constant 0 : index
      %151 = vector.load %arg2[%c0_52, %c0_53, %c0_54] : memref<1x8x28xbf16, #tpu.memory_space<vmem>>, vector<1x8x28xbf16>
      %152 = vector.shape_cast %151 : vector<1x8x28xbf16> to vector<8x28xbf16>
      %c0_55 = arith.constant 0 : index
      %c0_56 = arith.constant 0 : index
      %153 = vector.load %arg3[%c0_55, %c0_56] : memref<28x32xbf16, #tpu.memory_space<vmem>>, vector<28x32xbf16>
      %cst_57 = arith.constant dense<0.000000e+00> : vector<8x32xf32>
      %154 = tpu.matmul %152, %153, %cst_57 {dimension_numbers = #tpu.dot_dimension_numbers<[1], [0], [0], [1], [0, 0, 1, 1], [], []>} : vector<8x28xbf16>, vector<28x32xbf16>, vector<8x32xf32> -> vector<8x32xf32>
      %c0_58 = arith.constant 0 : index
      %c0_59 = arith.constant 0 : index
      %155 = vector.load %arg4[%c0_58, %c0_59] : memref<1x32xf32, #tpu.memory_space<vmem>>, vector<1x32xf32>
      %156 = vector.broadcast %155 : vector<1x32xf32> to vector<8x32xf32>
      %157 = arith.addf %154, %156 : vector<8x32xf32>
      %c0_60 = arith.constant 0 : index
      %c0_61 = arith.constant 0 : index
      %158 = vector.load %arg5[%c0_60, %c0_61] : memref<1x32xf32, #tpu.memory_space<vmem>>, vector<1x32xf32>
      %c0_62 = arith.constant 0 : index
      %c0_63 = arith.constant 0 : index
      %159 = vector.load %arg6[%c0_62, %c0_63] : memref<1x32xf32, #tpu.memory_space<vmem>>, vector<1x32xf32>
      %cst_64 = arith.constant dense<0.000000e+00> : vector<8xf32>
      %160 = vector.multi_reduction <add>, %157, %cst_64 [1] : vector<8x32xf32> to vector<8xf32>
      %161 = vector.shape_cast %160 : vector<8xf32> to vector<8x1xf32>
      %cst_65 = arith.constant 3.200000e+01 : f32
      %162 = vector.broadcast %cst_65 : f32 to vector<8x1xf32>
      %163 = arith.divf %161, %162 : vector<8x1xf32>
      %164 = vector.broadcast %163 : vector<8x1xf32> to vector<8x32xf32>
      %165 = arith.subf %157, %164 : vector<8x32xf32>
      %166 = arith.mulf %165, %165 : vector<8x32xf32>
      %cst_66 = arith.constant dense<0.000000e+00> : vector<8xf32>
      %167 = vector.multi_reduction <add>, %166, %cst_66 [1] : vector<8x32xf32> to vector<8xf32>
      %168 = vector.shape_cast %167 : vector<8xf32> to vector<8x1xf32>
      %cst_67 = arith.constant 3.200000e+01 : f32
      %169 = vector.broadcast %cst_67 : f32 to vector<8x1xf32>
      %170 = arith.divf %168, %169 : vector<8x1xf32>
      %cst_68 = arith.constant 9.99999974E-6 : f32
      %171 = vector.broadcast %cst_68 : f32 to vector<8x1xf32>
      %172 = arith.addf %170, %171 : vector<8x1xf32>
      %173 = math.rsqrt %172 : vector<8x1xf32>
      %174 = vector.broadcast %173 : vector<8x1xf32> to vector<8x32xf32>
      %175 = arith.mulf %165, %174 : vector<8x32xf32>
      %176 = vector.broadcast %158 : vector<1x32xf32> to vector<8x32xf32>
      %177 = arith.mulf %175, %176 : vector<8x32xf32>
      %178 = vector.broadcast %159 : vector<1x32xf32> to vector<8x32xf32>
      %179 = arith.addf %177, %178 : vector<8x32xf32>
      %c0_69 = arith.constant 0 : index
      %c0_70 = arith.constant 0 : index
      %180 = vector.load %arg16[%c0_69, %c0_70] : memref<8x32xf32, #tpu.memory_space<vmem>>, vector<8x32xf32>
      tpu.vector_store %arg16[%c0_69, %c0_70], %179 {strides = array<i32>} : memref<8x32xf32, #tpu.memory_space<vmem>>, vector<8x32xf32>,
    } else {
    }
    %c0 = arith.constant 0 : index
    %c0_1 = arith.constant 0 : index
    %3 = vector.load %arg16[%c0, %c0_1] : memref<8x32xf32, #tpu.memory_space<vmem>>, vector<8x32xf32>
    %c0_2 = arith.constant 0 : index
    %c0_3 = arith.constant 0 : index
    %c0_4 = arith.constant 0 : index
    %4 = vector.load %arg7[%c0_2, %c0_3, %c0_4] : memref<1x7x32xf32, #tpu.memory_space<vmem>>, vector<1x7x32xf32>
    %5 = vector.shape_cast %4 : vector<1x7x32xf32> to vector<7x32xf32>
    %6 = tpu.iota {dimensions = array<i32: 0>} : vector<8x1xi32>
    %7 = vector.extract_strided_slice %5 {offsets = [3, 0], sizes = [1, 32], strides = [1, 1]} : vector<7x32xf32> to vector<1x32xf32>
    %8 = vector.broadcast %7 : vector<1x32xf32> to vector<8x32xf32>
    %9 = arith.mulf %3, %8 : vector<8x32xf32>
    %c3_i32 = arith.constant 3 : i32
    %10 = tpu.dynamic_rotate %3 by %c3_i32 dim 0 : vector<8x32xf32>, i32 -> vector<8x32xf32>
    %c3_i32_5 = arith.constant 3 : i32
    %11 = vector.broadcast %c3_i32_5 : i32 to vector<8x1xi32>
    %12 = arith.cmpi sge, %6, %11 : vector<8x1xi32>
    %c11_i32 = arith.constant 11 : i32
    %13 = vector.broadcast %c11_i32 : i32 to vector<8x1xi32>
    %14 = arith.cmpi slt, %6, %13 : vector<8x1xi32>
    %15 = arith.andi %12, %14 : vector<8x1xi1>
    %cst = arith.constant 0.000000e+00 : f32
    %16 = vector.shape_cast %15 : vector<8x1xi1> to vector<8x1xi1>
    %17 = vector.broadcast %16 : vector<8x1xi1> to vector<8x32xi1>
    %18 = vector.broadcast %cst : f32 to vector<8x32xf32>
    %19 = arith.select %17, %10, %18 : vector<8x32xi1>, vector<8x32xf32>
    %20 = vector.extract_strided_slice %5 {offsets = [0, 0], sizes = [1, 32], strides = [1, 1]} : vector<7x32xf32> to vector<1x32xf32>
    %21 = vector.broadcast %20 : vector<1x32xf32> to vector<8x32xf32>
    %22 = arith.mulf %19, %21 : vector<8x32xf32>
    %23 = arith.addf %9, %22 : vector<8x32xf32>
    %c2_i32 = arith.constant 2 : i32
    %24 = tpu.dynamic_rotate %3 by %c2_i32 dim 0 : vector<8x32xf32>, i32 -> vector<8x32xf32>
    %c2_i32_6 = arith.constant 2 : i32
    %25 = vector.broadcast %c2_i32_6 : i32 to vector<8x1xi32>
    %26 = arith.cmpi sge, %6, %25 : vector<8x1xi32>
    %c10_i32 = arith.constant 10 : i32
    %27 = vector.broadcast %c10_i32 : i32 to vector<8x1xi32>
    %28 = arith.cmpi slt, %6, %27 : vector<8x1xi32>
    %29 = arith.andi %26, %28 : vector<8x1xi1>
    %cst_7 = arith.constant 0.000000e+00 : f32
    %30 = vector.shape_cast %29 : vector<8x1xi1> to vector<8x1xi1>
    %31 = vector.broadcast %30 : vector<8x1xi1> to vector<8x32xi1>
    %32 = vector.broadcast %cst_7 : f32 to vector<8x32xf32>
    %33 = arith.select %31, %24, %32 : vector<8x32xi1>, vector<8x32xf32>
    %34 = vector.extract_strided_slice %5 {offsets = [1, 0], sizes = [1, 32], strides = [1, 1]} : vector<7x32xf32> to vector<1x32xf32>
    %35 = vector.broadcast %34 : vector<1x32xf32> to vector<8x32xf32>
    %36 = arith.mulf %33, %35 : vector<8x32xf32>
    %37 = arith.addf %23, %36 : vector<8x32xf32>
    %c1_i32 = arith.constant 1 : i32
    %38 = tpu.dynamic_rotate %3 by %c1_i32 dim 0 : vector<8x32xf32>, i32 -> vector<8x32xf32>
    %c1_i32_8 = arith.constant 1 : i32
    %39 = vector.broadcast %c1_i32_8 : i32 to vector<8x1xi32>
    %40 = arith.cmpi sge, %6, %39 : vector<8x1xi32>
    %c9_i32 = arith.constant 9 : i32
    %41 = vector.broadcast %c9_i32 : i32 to vector<8x1xi32>
    %42 = arith.cmpi slt, %6, %41 : vector<8x1xi32>
    %43 = arith.andi %40, %42 : vector<8x1xi1>
    %cst_9 = arith.constant 0.000000e+00 : f32
    %44 = vector.shape_cast %43 : vector<8x1xi1> to vector<8x1xi1>
    %45 = vector.broadcast %44 : vector<8x1xi1> to vector<8x32xi1>
    %46 = vector.broadcast %cst_9 : f32 to vector<8x32xf32>
    %47 = arith.select %45, %38, %46 : vector<8x32xi1>, vector<8x32xf32>
    %48 = vector.extract_strided_slice %5 {offsets = [2, 0], sizes = [1, 32], strides = [1, 1]} : vector<7x32xf32> to vector<1x32xf32>
    %49 = vector.broadcast %48 : vector<1x32xf32> to vector<8x32xf32>
    %50 = arith.mulf %47, %49 : vector<8x32xf32>
    %51 = arith.addf %37, %50 : vector<8x32xf32>
    %c7_i32 = arith.constant 7 : i32
    %52 = tpu.dynamic_rotate %3 by %c7_i32 dim 0 : vector<8x32xf32>, i32 -> vector<8x32xf32>
    %c-1_i32 = arith.constant -1 : i32
    %53 = vector.broadcast %c-1_i32 : i32 to vector<8x1xi32>
    %54 = arith.cmpi sge, %6, %53 : vector<8x1xi32>
    %c7_i32_10 = arith.constant 7 : i32
    %55 = vector.broadcast %c7_i32_10 : i32 to vector<8x1xi32>
    %56 = arith.cmpi slt, %6, %55 : vector<8x1xi32>
    %57 = arith.andi %54, %56 : vector<8x1xi1>
    %cst_11 = arith.constant 0.000000e+00 : f32
    %58 = vector.shape_cast %57 : vector<8x1xi1> to vector<8x1xi1>
    %59 = vector.broadcast %58 : vector<8x1xi1> to vector<8x32xi1>
    %60 = vector.broadcast %cst_11 : f32 to vector<8x32xf32>
    %61 = arith.select %59, %52, %60 : vector<8x32xi1>, vector<8x32xf32>
    %62 = vector.extract_strided_slice %5 {offsets = [4, 0], sizes = [1, 32], strides = [1, 1]} : vector<7x32xf32> to vector<1x32xf32>
    %63 = vector.broadcast %62 : vector<1x32xf32> to vector<8x32xf32>
    %64 = arith.mulf %61, %63 : vector<8x32xf32>
    %65 = arith.addf %51, %64 : vector<8x32xf32>
    %c6_i32 = arith.constant 6 : i32
    %66 = tpu.dynamic_rotate %3 by %c6_i32 dim 0 : vector<8x32xf32>, i32 -> vector<8x32xf32>
    %c-2_i32 = arith.constant -2 : i32
    %67 = vector.broadcast %c-2_i32 : i32 to vector<8x1xi32>
    %68 = arith.cmpi sge, %6, %67 : vector<8x1xi32>
    %c6_i32_12 = arith.constant 6 : i32
    %69 = vector.broadcast %c6_i32_12 : i32 to vector<8x1xi32>
    %70 = arith.cmpi slt, %6, %69 : vector<8x1xi32>
    %71 = arith.andi %68, %70 : vector<8x1xi1>
    %cst_13 = arith.constant 0.000000e+00 : f32
    %72 = vector.shape_cast %71 : vector<8x1xi1> to vector<8x1xi1>
    %73 = vector.broadcast %72 : vector<8x1xi1> to vector<8x32xi1>
    %74 = vector.broadcast %cst_13 : f32 to vector<8x32xf32>
    %75 = arith.select %73, %66, %74 : vector<8x32xi1>, vector<8x32xf32>
    %76 = vector.extract_strided_slice %5 {offsets = [5, 0], sizes = [1, 32], strides = [1, 1]} : vector<7x32xf32> to vector<1x32xf32>
    %77 = vector.broadcast %76 : vector<1x32xf32> to vector<8x32xf32>
    %78 = arith.mulf %75, %77 : vector<8x32xf32>
    %79 = arith.addf %65, %78 : vector<8x32xf32>
    %c5_i32 = arith.constant 5 : i32
    %80 = tpu.dynamic_rotate %3 by %c5_i32 dim 0 : vector<8x32xf32>, i32 -> vector<8x32xf32>
    %c-3_i32 = arith.constant -3 : i32
    %81 = vector.broadcast %c-3_i32 : i32 to vector<8x1xi32>
    %82 = arith.cmpi sge, %6, %81 : vector<8x1xi32>
    %c5_i32_14 = arith.constant 5 : i32
    %83 = vector.broadcast %c5_i32_14 : i32 to vector<8x1xi32>
    %84 = arith.cmpi slt, %6, %83 : vector<8x1xi32>
    %85 = arith.andi %82, %84 : vector<8x1xi1>
    %cst_15 = arith.constant 0.000000e+00 : f32
    %86 = vector.shape_cast %85 : vector<8x1xi1> to vector<8x1xi1>
    %87 = vector.broadcast %86 : vector<8x1xi1> to vector<8x32xi1>
    %88 = vector.broadcast %cst_15 : f32 to vector<8x32xf32>
    %89 = arith.select %87, %80, %88 : vector<8x32xi1>, vector<8x32xf32>
    %90 = vector.extract_strided_slice %5 {offsets = [6, 0], sizes = [1, 32], strides = [1, 1]} : vector<7x32xf32> to vector<1x32xf32>
    %91 = vector.broadcast %90 : vector<1x32xf32> to vector<8x32xf32>
    %92 = arith.mulf %89, %91 : vector<8x32xf32>
    %93 = arith.addf %79, %92 : vector<8x32xf32>
    %c0_16 = arith.constant 0 : index
    %c0_17 = arith.constant 0 : index
    %c0_18 = arith.constant 0 : index
    %94 = vector.load %arg8[%c0_16, %c0_17, %c0_18] : memref<1x1x32xf32, #tpu.memory_space<vmem>>, vector<1x1x32xf32>
    %95 = vector.shape_cast %94 : vector<1x1x32xf32> to vector<1x32xf32>
    %96 = vector.broadcast %95 : vector<1x32xf32> to vector<8x32xf32>
    %97 = arith.addf %93, %96 : vector<8x32xf32>
    %cst_19 = arith.constant dense<0.000000e+00> : vector<8xf32>
    %98 = vector.multi_reduction <add>, %97, %cst_19 [1] : vector<8x32xf32> to vector<8xf32>
    %99 = vector.shape_cast %98 : vector<8xf32> to vector<8x1xf32>
    %cst_20 = arith.constant 3.200000e+01 : f32
    %100 = vector.broadcast %cst_20 : f32 to vector<8x1xf32>
    %101 = arith.divf %99, %100 : vector<8x1xf32>
    %102 = vector.broadcast %101 : vector<8x1xf32> to vector<8x32xf32>
    %103 = arith.subf %97, %102 : vector<8x32xf32>
    %104 = arith.mulf %103, %103 : vector<8x32xf32>
    %cst_21 = arith.constant dense<0.000000e+00> : vector<8xf32>
    %105 = vector.multi_reduction <add>, %104, %cst_21 [1] : vector<8x32xf32> to vector<8xf32>
    %106 = vector.shape_cast %105 : vector<8xf32> to vector<8x1xf32>
    %cst_22 = arith.constant 3.200000e+01 : f32
    %107 = vector.broadcast %cst_22 : f32 to vector<8x1xf32>
    %108 = arith.divf %106, %107 : vector<8x1xf32>
    %cst_23 = arith.constant 9.99999974E-6 : f32
    %109 = vector.broadcast %cst_23 : f32 to vector<8x1xf32>
    %110 = arith.addf %108, %109 : vector<8x1xf32>
    %111 = math.rsqrt %110 : vector<8x1xf32>
    %112 = vector.broadcast %111 : vector<8x1xf32> to vector<8x32xf32>
    %113 = arith.mulf %103, %112 : vector<8x32xf32>
    %c0_24 = arith.constant 0 : index
    %c0_25 = arith.constant 0 : index
    %114 = vector.load %arg17[%c0_24, %c0_25] : memref<8x32xf32, #tpu.memory_space<vmem>>, vector<8x32xf32>
    tpu.vector_store %arg17[%c0_24, %c0_25], %113 {strides = array<i32>} : memref<8x32xf32, #tpu.memory_space<vmem>>, vector<8x32xf32>,
    %c0_26 = arith.constant 0 : index
    %c0_27 = arith.constant 0 : index
    %115 = vector.load %arg17[%c0_26, %c0_27] : memref<8x32xf32, #tpu.memory_space<vmem>>, vector<8x32xf32>
    %116 = arith.truncf %115 : vector<8x32xf32> to vector<8x32xbf16>
    %c0_28 = arith.constant 0 : index
    %c0_29 = arith.constant 0 : index
    %c0_30 = arith.constant 0 : index
    %117 = vector.load %arg9[%c0_28, %c0_29, %c0_30] : memref<1x32x64xbf16, #tpu.memory_space<vmem>>, vector<1x32x64xbf16>
    %118 = vector.shape_cast %117 : vector<1x32x64xbf16> to vector<32x64xbf16>
    %cst_31 = arith.constant dense<0.000000e+00> : vector<8x64xf32>
    %119 = tpu.matmul %116, %118, %cst_31 {dimension_numbers = #tpu.dot_dimension_numbers<[1], [0], [0], [1], [0, 0, 1, 1], [], []>} : vector<8x32xbf16>, vector<32x64xbf16>, vector<8x64xf32> -> vector<8x64xf32>
    %c0_32 = arith.constant 0 : index
    %c0_33 = arith.constant 0 : index
    %c0_34 = arith.constant 0 : index
    %120 = vector.load %arg10[%c0_32, %c0_33, %c0_34] : memref<1x1x64xf32, #tpu.memory_space<vmem>>, vector<1x1x64xf32>
    %121 = vector.shape_cast %120 : vector<1x1x64xf32> to vector<1x64xf32>
    %122 = vector.broadcast %121 : vector<1x64xf32> to vector<8x64xf32>
    %123 = arith.addf %119, %122 : vector<8x64xf32>
    %cst_35 = arith.constant 5.000000e-01 : f32
    %124 = vector.broadcast %cst_35 : f32 to vector<8x64xf32>
    %125 = arith.mulf %124, %123 : vector<8x64xf32>
    %cst_36 = arith.constant 4.471500e-02 : f32
    %126 = vector.broadcast %cst_36 : f32 to vector<8x64xf32>
    %127 = arith.mulf %126, %123 : vector<8x64xf32>
    %128 = arith.mulf %127, %123 : vector<8x64xf32>
    %129 = arith.mulf %128, %123 : vector<8x64xf32>
    %130 = arith.addf %123, %129 : vector<8x64xf32>
    %cst_37 = arith.constant 0.797884583 : f32
    %131 = vector.broadcast %cst_37 : f32 to vector<8x64xf32>
    %132 = arith.mulf %131, %130 : vector<8x64xf32>
    %133 = math.tanh %132 : vector<8x64xf32>
    %cst_38 = arith.constant 1.000000e+00 : f32
    %134 = vector.broadcast %cst_38 : f32 to vector<8x64xf32>
    %135 = arith.addf %134, %133 : vector<8x64xf32>
    %136 = arith.mulf %125, %135 : vector<8x64xf32>
    %137 = arith.truncf %136 : vector<8x64xf32> to vector<8x64xbf16>
    %c0_39 = arith.constant 0 : index
    %c0_40 = arith.constant 0 : index
    %c0_41 = arith.constant 0 : index
    %138 = vector.load %arg11[%c0_39, %c0_40, %c0_41] : memref<1x64x32xbf16, #tpu.memory_space<vmem>>, vector<1x64x32xbf16>
    %139 = vector.shape_cast %138 : vector<1x64x32xbf16> to vector<64x32xbf16>
    %cst_42 = arith.constant dense<0.000000e+00> : vector<8x32xf32>
    %140 = tpu.matmul %137, %139, %cst_42 {dimension_numbers = #tpu.dot_dimension_numbers<[1], [0], [0], [1], [0, 0, 1, 1], [], []>} : vector<8x64xbf16>, vector<64x32xbf16>, vector<8x32xf32> -> vector<8x32xf32>
    %c0_43 = arith.constant 0 : index
    %c0_44 = arith.constant 0 : index
    %c0_45 = arith.constant 0 : index
    %141 = vector.load %arg12[%c0_43, %c0_44, %c0_45] : memref<1x1x32xf32, #tpu.memory_space<vmem>>, vector<1x1x32xf32>
    %142 = vector.shape_cast %141 : vector<1x1x32xf32> to vector<1x32xf32>
    %143 = vector.broadcast %142 : vector<1x32xf32> to vector<8x32xf32>
    %144 = arith.addf %140, %143 : vector<8x32xf32>
    %c0_46 = arith.constant 0 : index
    %c0_47 = arith.constant 0 : index
    %145 = vector.load %arg16[%c0_46, %c0_47] : memref<8x32xf32, #tpu.memory_space<vmem>>, vector<8x32xf32>
    %146 = arith.addf %145, %144 : vector<8x32xf32>
    %c0_48 = arith.constant 0 : index
    %c0_49 = arith.constant 0 : index
    %147 = vector.load %arg16[%c0_48, %c0_49] : memref<8x32xf32, #tpu.memory_space<vmem>>, vector<8x32xf32>
    tpu.vector_store %arg16[%c0_48, %c0_49], %146 {strides = array<i32>} : memref<8x32xf32, #tpu.memory_space<vmem>>, vector<8x32xf32>,
    %c1_i32_50 = arith.constant 1 : i32
    %148 = arith.cmpi eq, %arg1, %c1_i32_50 : i32
    %149 = arith.extui %148 : i1 to i32
    %c0_i32_51 = arith.constant 0 : i32
    %150 = arith.cmpi ne, %149, %c0_i32_51 : i32
    scf.if %150 {
      %c0_52 = arith.constant 0 : index
      %c0_53 = arith.constant 0 : index
      %151 = vector.load %arg16[%c0_52, %c0_53] : memref<8x32xf32, #tpu.memory_space<vmem>>, vector<8x32xf32>
      %cst_54 = arith.constant dense<0.000000e+00> : vector<8xf32>
      %152 = vector.multi_reduction <add>, %151, %cst_54 [1] : vector<8x32xf32> to vector<8xf32>
      %153 = vector.shape_cast %152 : vector<8xf32> to vector<8x1xf32>
      %cst_55 = arith.constant 3.200000e+01 : f32
      %154 = vector.broadcast %cst_55 : f32 to vector<8x1xf32>
      %155 = arith.divf %153, %154 : vector<8x1xf32>
      %156 = vector.broadcast %155 : vector<8x1xf32> to vector<8x32xf32>
      %157 = arith.subf %151, %156 : vector<8x32xf32>
      %158 = arith.mulf %157, %157 : vector<8x32xf32>
      %cst_56 = arith.constant dense<0.000000e+00> : vector<8xf32>
      %159 = vector.multi_reduction <add>, %158, %cst_56 [1] : vector<8x32xf32> to vector<8xf32>
      %160 = vector.shape_cast %159 : vector<8xf32> to vector<8x1xf32>
      %cst_57 = arith.constant 3.200000e+01 : f32
      %161 = vector.broadcast %cst_57 : f32 to vector<8x1xf32>
      %162 = arith.divf %160, %161 : vector<8x1xf32>
      %cst_58 = arith.constant 9.99999974E-6 : f32
      %163 = vector.broadcast %cst_58 : f32 to vector<8x1xf32>
      %164 = arith.addf %162, %163 : vector<8x1xf32>
      %165 = math.rsqrt %164 : vector<8x1xf32>
      %166 = vector.broadcast %165 : vector<8x1xf32> to vector<8x32xf32>
      %167 = arith.mulf %157, %166 : vector<8x32xf32>
      %168 = arith.truncf %167 : vector<8x32xf32> to vector<8x32xbf16>
      %c0_59 = arith.constant 0 : index
      %c0_60 = arith.constant 0 : index
      %169 = vector.load %arg13[%c0_59, %c0_60] : memref<32x128xbf16, #tpu.memory_space<vmem>>, vector<32x128xbf16>
      %cst_61 = arith.constant dense<0.000000e+00> : vector<8x128xf32>
      %170 = tpu.matmul %168, %169, %cst_61 {dimension_numbers = #tpu.dot_dimension_numbers<[1], [0], [0], [1], [0, 0, 1, 1], [], []>} : vector<8x32xbf16>, vector<32x128xbf16>, vector<8x128xf32> -> vector<8x128xf32>
      %c0_62 = arith.constant 0 : index
      %c0_63 = arith.constant 0 : index
      %171 = vector.load %arg14[%c0_62, %c0_63] : memref<1x128xf32, #tpu.memory_space<vmem>>, vector<1x128xf32>
      %172 = vector.broadcast %171 : vector<1x128xf32> to vector<8x128xf32>
      %173 = arith.addf %170, %172 : vector<8x128xf32>
      %174 = math.tanh %173 : vector<8x128xf32>
      %c0_64 = arith.constant 0 : index
      %c0_65 = arith.constant 0 : index
      %c0_66 = arith.constant 0 : index
      %175 = vector.load %arg15[%c0_64, %c0_65, %c0_66] : memref<1x8x128xf32, #tpu.memory_space<vmem>>, vector<1x8x128xf32>
      %176 = vector.shape_cast %175 : vector<1x8x128xf32> to vector<8x128xf32>
      %177 = vector.shape_cast %174 : vector<8x128xf32> to vector<1x8x128xf32>
      tpu.vector_store %arg15[%c0_64, %c0_65, %c0_66], %177 {strides = array<i32>} : memref<1x8x128xf32, #tpu.memory_space<vmem>>, vector<1x8x128xf32>,
    } else {
    }
    return
  }
  func.func @transform_0(%arg0: i32, %arg1: i32) -> (i32, i32, i32) {
    %c0_i32 = arith.constant 0 : i32
    %c0_i32_0 = arith.constant 0 : i32
    %c0_i32_1 = arith.constant 0 : i32
    return %arg0, %c0_i32, %c0_i32_0 : i32, i32, i32
  }
  func.func @transform_1(%arg0: i32, %arg1: i32) -> (i32, i32) {
    %c0_i32 = arith.constant 0 : i32
    %c0_i32_0 = arith.constant 0 : i32
    %c0_i32_1 = arith.constant 0 : i32
    return %c0_i32, %c0_i32_0 : i32, i32
  }
  func.func @transform_2(%arg0: i32, %arg1: i32) -> (i32, i32) {
    %c0_i32 = arith.constant 0 : i32
    %c0_i32_0 = arith.constant 0 : i32
    %c0_i32_1 = arith.constant 0 : i32
    return %c0_i32, %c0_i32_0 : i32, i32
  }
  func.func @transform_3(%arg0: i32, %arg1: i32) -> (i32, i32) {
    %c0_i32 = arith.constant 0 : i32
    %c0_i32_0 = arith.constant 0 : i32
    %c0_i32_1 = arith.constant 0 : i32
    return %c0_i32, %c0_i32_0 : i32, i32
  }
  func.func @transform_4(%arg0: i32, %arg1: i32) -> (i32, i32) {
    %c0_i32 = arith.constant 0 : i32
    %c0_i32_0 = arith.constant 0 : i32
    %c0_i32_1 = arith.constant 0 : i32
    return %c0_i32, %c0_i32_0 : i32, i32
  }
  func.func @transform_5(%arg0: i32, %arg1: i32) -> (i32, i32, i32) {
    %c0_i32 = arith.constant 0 : i32
    %c0_i32_0 = arith.constant 0 : i32
    %c0_i32_1 = arith.constant 0 : i32
    return %arg1, %c0_i32, %c0_i32_0 : i32, i32, i32
  }
  func.func @transform_6(%arg0: i32, %arg1: i32) -> (i32, i32, i32) {
    %c0_i32 = arith.constant 0 : i32
    %c0_i32_0 = arith.constant 0 : i32
    %c0_i32_1 = arith.constant 0 : i32
    return %arg1, %c0_i32, %c0_i32_0 : i32, i32, i32
  }
  func.func @transform_7(%arg0: i32, %arg1: i32) -> (i32, i32, i32) {
    %c0_i32 = arith.constant 0 : i32
    %c0_i32_0 = arith.constant 0 : i32
    %c0_i32_1 = arith.constant 0 : i32
    return %arg1, %c0_i32, %c0_i32_0 : i32, i32, i32
  }
  func.func @transform_8(%arg0: i32, %arg1: i32) -> (i32, i32, i32) {
    %c0_i32 = arith.constant 0 : i32
    %c0_i32_0 = arith.constant 0 : i32
    %c0_i32_1 = arith.constant 0 : i32
    return %arg1, %c0_i32, %c0_i32_0 : i32, i32, i32
  }
  func.func @transform_9(%arg0: i32, %arg1: i32) -> (i32, i32, i32) {
    %c0_i32 = arith.constant 0 : i32
    %c0_i32_0 = arith.constant 0 : i32
    %c0_i32_1 = arith.constant 0 : i32
    return %arg1, %c0_i32, %c0_i32_0 : i32, i32, i32
  }
  func.func @transform_10(%arg0: i32, %arg1: i32) -> (i32, i32, i32) {
    %c0_i32 = arith.constant 0 : i32
    %c0_i32_0 = arith.constant 0 : i32
    %c0_i32_1 = arith.constant 0 : i32
    return %arg1, %c0_i32, %c0_i32_0 : i32, i32, i32
  }
  func.func @transform_11(%arg0: i32, %arg1: i32) -> (i32, i32) {
    %c0_i32 = arith.constant 0 : i32
    %c0_i32_0 = arith.constant 0 : i32
    %c0_i32_1 = arith.constant 0 : i32
    return %c0_i32, %c0_i32_0 : i32, i32
  }
  func.func @transform_12(%arg0: i32, %arg1: i32) -> (i32, i32) {
    %c0_i32 = arith.constant 0 : i32
    %c0_i32_0 = arith.constant 0 : i32
    %c0_i32_1 = arith.constant 0 : i32
    return %c0_i32, %c0_i32_0 : i32, i32
  }
  func.func @transform_13(%arg0: i32, %arg1: i32) -> (i32, i32, i32) {
    %c0_i32 = arith.constant 0 : i32
    %c0_i32_0 = arith.constant 0 : i32
    %c0_i32_1 = arith.constant 0 : i32
    return %arg0, %c0_i32, %c0_i32_0 : i32, i32, i32
  }
}

</mosaic_0001>

<llo_original>
// kernel: tpu_custom_call.1
$region0: #{tpu_custom_call.1}
  #allocation0 [shape = 'u32[]', space=smem, size = 0x4, offset = 0x4, fixed_abs, tag = 'smem constant byte address 0x4 - core index']
  #allocation1 [shape = 'u32[144,128]{1,0:T(1,128)}', space=vmem, size = 0x12000, scoped, tag = 'internal scratch']
  #allocation2 [shape = 'f32[8,32]{1,0:T(8,128)}', space=vmem, size = 0x1000, scoped, tag = 'scratch operand']
  #allocation3 [shape = 'f32[8,32]{1,0:T(8,128)}', space=vmem, size = 0x1000, scoped, tag = 'scratch operand']
  %s0 = inlined_call_operand.vmem [shape: bf16[2,8,28], index: 0, kind: input, shape index: {}]
  %s1 = inlined_call_operand.vmem [shape: bf16[28,32], index: 1, kind: input, shape index: {}]
  %s2 = inlined_call_operand.vmem [shape: f32[1,32], index: 2, kind: input, shape index: {}]
  %s3 = inlined_call_operand.vmem [shape: f32[1,32], index: 3, kind: input, shape index: {}]
  %s4 = inlined_call_operand.vmem [shape: f32[1,32], index: 4, kind: input, shape index: {}]
  %s5 = inlined_call_operand.vmem [shape: f32[2,7,32], index: 5, kind: input, shape index: {}]
  %s6 = inlined_call_operand.vmem [shape: f32[2,1,32], index: 6, kind: input, shape index: {}]
  %s7 = inlined_call_operand.vmem [shape: bf16[2,32,64], index: 7, kind: input, shape index: {}]
  %s8 = inlined_call_operand.vmem [shape: f32[2,1,64], index: 8, kind: input, shape index: {}]
  %s9 = inlined_call_operand.vmem [shape: bf16[2,64,32], index: 9, kind: input, shape index: {}]
  %s10 = inlined_call_operand.vmem [shape: f32[2,1,32], index: 10, kind: input, shape index: {}]
  %s11 = inlined_call_operand.vmem [shape: bf16[32,128], index: 11, kind: input, shape index: {}]
  %s12 = inlined_call_operand.vmem [shape: f32[1,128], index: 12, kind: input, shape index: {}]
  %s13 = inlined_call_operand.hbm [shape: f32[2,8,128], index: 13, kind: output, shape index: {}]
  %s14 = sld [smem:[#allocation0]]
  $region93: #{tpu_custom_call.1} parent=0
    _
  %s16 = ssub.s32 1, %s14
  %s17 = scalar_select 0, %s16, %s14
  $region1: #{tpu_custom_call.1} parent=0
    #allocation4 [shape = 'u8[8192]{0}', space=vmem, size = 0x2000, scoped, tag = 'output window, operand 0']
    #allocation5 [shape = 's32[2]{0}', space=sflag, size = 0x8, scoped, tag = 'scoped memory for tpu_custom_call.1']
    %18 = vsyncpa [#allocation5], 0
    %s19 = scalar_lea.sflag [#allocation5], 1
    %20 = vsyncpa %s19, 0
    loop: start=0, step=1, limit=6
    $region2: #{tpu_custom_call.1} parent=1 // loop_pre_header
      _
    $region3: #{tpu_custom_call.1} parent=1 // loop_header
      %s22 = sphi 0, %s26
      %p23 = scmp.ge.s32.totalorder %s22, 6
      %s29 = sphi 0, %s41
      %s30 = sphi 0, %s37
      %s31 = sphi 0, %s29
      %s32 = sphi 0, %s30
      %s33 = sphi 0, %s31
      %s34 = sphi 0, %s32
      %s44 = sphi 0, %s46
      %s47 = sphi 0, %s44
      %s48 = sphi 0, %s47
      %s64 = sphi 0, %s48
      %s68 = sphi 0, %s68
      %s70 = sphi 0, %s68
      %s71 = sphi 0, %s70
      %s85 = sphi 0, %s71
      %s89 = sphi 0, %s89
      %s91 = sphi 0, %s89
      %s92 = sphi 0, %s91
      %s106 = sphi 0, %s92
      %s110 = sphi 0, %s110
      %s112 = sphi 0, %s110
      %s113 = sphi 0, %s112
      %s127 = sphi 0, %s113
      %s131 = sphi 0, %s131
      %s133 = sphi 0, %s131
      %s134 = sphi 0, %s133
      %s148 = sphi 0, %s134
      %s154 = sphi 0, %s156
      %s157 = sphi 0, %s154
      %s158 = sphi 0, %s157
      %s174 = sphi 0, %s158
      %s180 = sphi 0, %s182
      %s183 = sphi 0, %s180
      %s184 = sphi 0, %s183
      %s200 = sphi 0, %s184
      %s206 = sphi 0, %s208
      %s209 = sphi 0, %s206
      %s210 = sphi 0, %s209
      %s226 = sphi 0, %s210
      %s232 = sphi 0, %s234
      %s235 = sphi 0, %s232
      %s236 = sphi 0, %s235
      %s252 = sphi 0, %s236
      %s258 = sphi 0, %s260
      %s261 = sphi 0, %s258
      %s262 = sphi 0, %s261
      %s278 = sphi 0, %s262
      %s284 = sphi 0, %s286
      %s287 = sphi 0, %s284
      %s288 = sphi 0, %s287
      %s304 = sphi 0, %s288
      %s308 = sphi 0, %s308
      %s310 = sphi 0, %s308
      %s311 = sphi 0, %s310
      %s325 = sphi 0, %s311
      %s329 = sphi 0, %s329
      %s331 = sphi 0, %s329
      %s332 = sphi 0, %s331
      %s346 = sphi 0, %s332
      %s352 = sphi 0, %s354
      %s355 = sphi 0, %s352
      %s356 = sphi 0, %s355
      %s372 = sphi 0, %s356
    $region4: #{tpu_custom_call.1} parent=1 // loop_header_branch
      %25 = sbr.rel (%p23) target = $region8
    $region5: #{tpu_custom_call.1} parent=1 // loop_body
      %s27 = ssub.s32 %s22, 1
      %s28 = ssub.s32 %s22, 2
      %s35 = sadd.s32 1, %s30
      %p36 = scmp.ge.s32.totalorder %s35, 2
      %s37 = scalar_select %p36, 0, %s35
      %s38 = sadd.s32 1, %s29
      %s39 = scalar_select %p36, %s38, %s29
      %p40 = scmp.ge.s32.totalorder %s39, 2
      %s41 = scalar_select %p40, 0, %s39
      %s42 = ssub.s32 %s29, %s41
      %p43 = scmp.eq.s32.totalorder %s42, 0
      %s45 = sadd.s32 %s44, 1
      %s46 = scalar_select %p43, %s44, %s45
      %p49 = pneg %p43
      %p50 = scmp.eq.s32.totalorder %s22, 3
      %p51 = por %p49, %p50
      %p52 = scmp.ne.s32.totalorder %s44, %s47
      %p53 = scmp.eq.s32.totalorder %s22, 0
      %p54 = por %p52, %p53
      %p55 = scmp.ne.s32.totalorder %s44, %s47
      %p56 = scmp.eq.s32.totalorder %s27, 3
      %p57 = por %p55, %p56
      %p58 = scmp.ne.s32.totalorder %s47, %s48
      %p59 = scmp.eq.s32.totalorder %s27, 0
      %p60 = por %p58, %p59
      %p61 = scmp.ne.s32.totalorder %s47, %s48
      %p62 = scmp.eq.s32.totalorder %s28, 3
      %p63 = por %p61, %p62
      %p65 = scmp.ne.s32.totalorder %s48, %s64
      %p66 = scmp.eq.s32.totalorder %s28, 0
      %p67 = por %p65, %p66
      %s69 = sadd.s32 %s68, 1
      %p72 = scmp.eq.s32.totalorder %s22, 3
      %p73 = scmp.ne.s32.totalorder %s68, %s70
      %p74 = scmp.eq.s32.totalorder %s22, 0
      %p75 = por %p73, %p74
      %p76 = scmp.ne.s32.totalorder %s68, %s70
      %p77 = scmp.eq.s32.totalorder %s27, 3
      %p78 = por %p76, %p77
      %p79 = scmp.ne.s32.totalorder %s70, %s71
      %p80 = scmp.eq.s32.totalorder %s27, 0
      %p81 = por %p79, %p80
      %p82 = scmp.ne.s32.totalorder %s70, %s71
      %p83 = scmp.eq.s32.totalorder %s28, 3
      %p84 = por %p82, %p83
      %p86 = scmp.ne.s32.totalorder %s71, %s85
      %p87 = scmp.eq.s32.totalorder %s28, 0
      %p88 = por %p86, %p87
      %s90 = sadd.s32 %s89, 1
      %p93 = scmp.eq.s32.totalorder %s22, 3
      %p94 = scmp.ne.s32.totalorder %s89, %s91
      %p95 = scmp.eq.s32.totalorder %s22, 0
      %p96 = por %p94, %p95
      %p97 = scmp.ne.s32.totalorder %s89, %s91
      %p98 = scmp.eq.s32.totalorder %s27, 3
      %p99 = por %p97, %p98
      %p100 = scmp.ne.s32.totalorder %s91, %s92
      %p101 = scmp.eq.s32.totalorder %s27, 0
      %p102 = por %p100, %p101
      %p103 = scmp.ne.s32.totalorder %s91, %s92
      %p104 = scmp.eq.s32.totalorder %s28, 3
      %p105 = por %p103, %p104
      %p107 = scmp.ne.s32.totalorder %s92, %s106
      %p108 = scmp.eq.s32.totalorder %s28, 0
      %p109 = por %p107, %p108
      %s111 = sadd.s32 %s110, 1
      %p114 = scmp.eq.s32.totalorder %s22, 3
      %p115 = scmp.ne.s32.totalorder %s110, %s112
      %p116 = scmp.eq.s32.totalorder %s22, 0
      %p117 = por %p115, %p116
      %p118 = scmp.ne.s32.totalorder %s110, %s112
      %p119 = scmp.eq.s32.totalorder %s27, 3
      %p120 = por %p118, %p119
      %p121 = scmp.ne.s32.totalorder %s112, %s113
      %p122 = scmp.eq.s32.totalorder %s27, 0
      %p123 = por %p121, %p122
      %p124 = scmp.ne.s32.totalorder %s112, %s113
      %p125 = scmp.eq.s32.totalorder %s28, 3
      %p126 = por %p124, %p125
      %p128 = scmp.ne.s32.totalorder %s113, %s127
      %p129 = scmp.eq.s32.totalorder %s28, 0
      %p130 = por %p128, %p129
      %s132 = sadd.s32 %s131, 1
      %p135 = scmp.eq.s32.totalorder %s22, 3
      %p136 = scmp.ne.s32.totalorder %s131, %s133
      %p137 = scmp.eq.s32.totalorder %s22, 0
      %p138 = por %p136, %p137
      %p139 = scmp.ne.s32.totalorder %s131, %s133
      %p140 = scmp.eq.s32.totalorder %s27, 3
      %p141 = por %p139, %p140
      %p142 = scmp.ne.s32.totalorder %s133, %s134
      %p143 = scmp.eq.s32.totalorder %s27, 0
      %p144 = por %p142, %p143
      %p145 = scmp.ne.s32.totalorder %s133, %s134
      %p146 = scmp.eq.s32.totalorder %s28, 3
      %p147 = por %p145, %p146
      %p149 = scmp.ne.s32.totalorder %s134, %s148
      %p150 = scmp.eq.s32.totalorder %s28, 0
      %p151 = por %p149, %p150
      %s152 = ssub.s32 %s30, %s37
      %p153 = scmp.eq.s32.totalorder %s152, 0
      %s155 = sadd.s32 %s154, 1
      %s156 = scalar_select %p153, %s154, %s155
      %p159 = pneg %p153
      %p160 = scmp.eq.s32.totalorder %s22, 3
      %p161 = por %p159, %p160
      %p162 = scmp.ne.s32.totalorder %s154, %s157
      %p163 = scmp.eq.s32.totalorder %s22, 0
      %p164 = por %p162, %p163
      %p165 = scmp.ne.s32.totalorder %s154, %s157
      %p166 = scmp.eq.s32.totalorder %s27, 3
      %p167 = por %p165, %p166
      %p168 = scmp.ne.s32.totalorder %s157, %s158
      %p169 = scmp.eq.s32.totalorder %s27, 0
      %p170 = por %p168, %p169
      %p171 = scmp.ne.s32.totalorder %s157, %s158
      %p172 = scmp.eq.s32.totalorder %s28, 3
      %p173 = por %p171, %p172
      %p175 = scmp.ne.s32.totalorder %s158, %s174
      %p176 = scmp.eq.s32.totalorder %s28, 0
      %p177 = por %p175, %p176
      %s178 = ssub.s32 %s30, %s37
      %p179 = scmp.eq.s32.totalorder %s178, 0
      %s181 = sadd.s32 %s180, 1
      %s182 = scalar_select %p179, %s180, %s181
      %p185 = pneg %p179
      %p186 = scmp.eq.s32.totalorder %s22, 3
      %p187 = por %p185, %p186
      %p188 = scmp.ne.s32.totalorder %s180, %s183
      %p189 = scmp.eq.s32.totalorder %s22, 0
      %p190 = por %p188, %p189
      %p191 = scmp.ne.s32.totalorder %s180, %s183
      %p192 = scmp.eq.s32.totalorder %s27, 3
      %p193 = por %p191, %p192
      %p194 = scmp.ne.s32.totalorder %s183, %s184
      %p195 = scmp.eq.s32.totalorder %s27, 0
      %p196 = por %p194, %p195
      %p197 = scmp.ne.s32.totalorder %s183, %s184
      %p198 = scmp.eq.s32.totalorder %s28, 3
      %p199 = por %p197, %p198
      %p201 = scmp.ne.s32.totalorder %s184, %s200
      %p202 = scmp.eq.s32.totalorder %s28, 0
      %p203 = por %p201, %p202
      %s204 = ssub.s32 %s30, %s37
      %p205 = scmp.eq.s32.totalorder %s204, 0
      %s207 = sadd.s32 %s206, 1
      %s208 = scalar_select %p205, %s206, %s207
      %p211 = pneg %p205
      %p212 = scmp.eq.s32.totalorder %s22, 3
      %p213 = por %p211, %p212
      %p214 = scmp.ne.s32.totalorder %s206, %s209
      %p215 = scmp.eq.s32.totalorder %s22, 0
      %p216 = por %p214, %p215
      %p217 = scmp.ne.s32.totalorder %s206, %s209
      %p218 = scmp.eq.s32.totalorder %s27, 3
      %p219 = por %p217, %p218
      %p220 = scmp.ne.s32.totalorder %s209, %s210
      %p221 = scmp.eq.s32.totalorder %s27, 0
      %p222 = por %p220, %p221
      %p223 = scmp.ne.s32.totalorder %s209, %s210
      %p224 = scmp.eq.s32.totalorder %s28, 3
      %p225 = por %p223, %p224
      %p227 = scmp.ne.s32.totalorder %s210, %s226
      %p228 = scmp.eq.s32.totalorder %s28, 0
      %p229 = por %p227, %p228
      %s230 = ssub.s32 %s30, %s37
      %p231 = scmp.eq.s32.totalorder %s230, 0
      %s233 = sadd.s32 %s232, 1
      %s234 = scalar_select %p231, %s232, %s233
      %p237 = pneg %p231
      %p238 = scmp.eq.s32.totalorder %s22, 3
      %p239 = por %p237, %p238
      %p240 = scmp.ne.s32.totalorder %s232, %s235
      %p241 = scmp.eq.s32.totalorder %s22, 0
      %p242 = por %p240, %p241
      %p243 = scmp.ne.s32.totalorder %s232, %s235
      %p244 = scmp.eq.s32.totalorder %s27, 3
      %p245 = por %p243, %p244
      %p246 = scmp.ne.s32.totalorder %s235, %s236
      %p247 = scmp.eq.s32.totalorder %s27, 0
      %p248 = por %p246, %p247
      %p249 = scmp.ne.s32.totalorder %s235, %s236
      %p250 = scmp.eq.s32.totalorder %s28, 3
      %p251 = por %p249, %p250
      %p253 = scmp.ne.s32.totalorder %s236, %s252
      %p254 = scmp.eq.s32.totalorder %s28, 0
      %p255 = por %p253, %p254
      %s256 = ssub.s32 %s30, %s37
      %p257 = scmp.eq.s32.totalorder %s256, 0
      %s259 = sadd.s32 %s258, 1
      %s260 = scalar_select %p257, %s258, %s259
      %p263 = pneg %p257
      %p264 = scmp.eq.s32.totalorder %s22, 3
      %p265 = por %p263, %p264
      %p266 = scmp.ne.s32.totalorder %s258, %s261
      %p267 = scmp.eq.s32.totalorder %s22, 0
      %p268 = por %p266, %p267
      %p269 = scmp.ne.s32.totalorder %s258, %s261
      %p270 = scmp.eq.s32.totalorder %s27, 3
      %p271 = por %p269, %p270
      %p272 = scmp.ne.s32.totalorder %s261, %s262
      %p273 = scmp.eq.s32.totalorder %s27, 0
      %p274 = por %p272, %p273
      %p275 = scmp.ne.s32.totalorder %s261, %s262
      %p276 = scmp.eq.s32.totalorder %s28, 3
      %p277 = por %p275, %p276
      %p279 = scmp.ne.s32.totalorder %s262, %s278
      %p280 = scmp.eq.s32.totalorder %s28, 0
      %p281 = por %p279, %p280
      %s282 = ssub.s32 %s30, %s37
      %p283 = scmp.eq.s32.totalorder %s282, 0
      %s285 = sadd.s32 %s284, 1
      %s286 = scalar_select %p283, %s284, %s285
      %p289 = pneg %p283
      %p290 = scmp.eq.s32.totalorder %s22, 3
      %p291 = por %p289, %p290
      %p292 = scmp.ne.s32.totalorder %s284, %s287
      %p293 = scmp.eq.s32.totalorder %s22, 0
      %p294 = por %p292, %p293
      %p295 = scmp.ne.s32.totalorder %s284, %s287
      %p296 = scmp.eq.s32.totalorder %s27, 3
      %p297 = por %p295, %p296
      %p298 = scmp.ne.s32.totalorder %s287, %s288
      %p299 = scmp.eq.s32.totalorder %s27, 0
      %p300 = por %p298, %p299
      %p301 = scmp.ne.s32.totalorder %s287, %s288
      %p302 = scmp.eq.s32.totalorder %s28, 3
      %p303 = por %p301, %p302
      %p305 = scmp.ne.s32.totalorder %s288, %s304
      %p306 = scmp.eq.s32.totalorder %s28, 0
      %p307 = por %p305, %p306
      %s309 = sadd.s32 %s308, 1
      %p312 = scmp.eq.s32.totalorder %s22, 3
      %p313 = scmp.ne.s32.totalorder %s308, %s310
      %p314 = scmp.eq.s32.totalorder %s22, 0
      %p315 = por %p313, %p314
      %p316 = scmp.ne.s32.totalorder %s308, %s310
      %p317 = scmp.eq.s32.totalorder %s27, 3
      %p318 = por %p316, %p317
      %p319 = scmp.ne.s32.totalorder %s310, %s311
      %p320 = scmp.eq.s32.totalorder %s27, 0
      %p321 = por %p319, %p320
      %p322 = scmp.ne.s32.totalorder %s310, %s311
      %p323 = scmp.eq.s32.totalorder %s28, 3
      %p324 = por %p322, %p323
      %p326 = scmp.ne.s32.totalorder %s311, %s325
      %p327 = scmp.eq.s32.totalorder %s28, 0
      %p328 = por %p326, %p327
      %s330 = sadd.s32 %s329, 1
      %p333 = scmp.eq.s32.totalorder %s22, 3
      %p334 = scmp.ne.s32.totalorder %s329, %s331
      %p335 = scmp.eq.s32.totalorder %s22, 0
      %p336 = por %p334, %p335
      %p337 = scmp.ne.s32.totalorder %s329, %s331
      %p338 = scmp.eq.s32.totalorder %s27, 3
      %p339 = por %p337, %p338
      %p340 = scmp.ne.s32.totalorder %s331, %s332
      %p341 = scmp.eq.s32.totalorder %s27, 0
      %p342 = por %p340, %p341
      %p343 = scmp.ne.s32.totalorder %s331, %s332
      %p344 = scmp.eq.s32.totalorder %s28, 3
      %p345 = por %p343, %p344
      %p347 = scmp.ne.s32.totalorder %s332, %s346
      %p348 = scmp.eq.s32.totalorder %s28, 0
      %p349 = por %p347, %p348
      %s350 = ssub.s32 %s29, %s41
      %p351 = scmp.eq.s32.totalorder %s350, 0
      %s353 = sadd.s32 %s352, 1
      %s354 = scalar_select %p351, %s352, %s353
      %p357 = pneg %p351
      %p358 = scmp.eq.s32.totalorder %s22, 3
      %p359 = por %p357, %p358
      %p360 = scmp.ne.s32.totalorder %s352, %s355
      %p361 = scmp.eq.s32.totalorder %s22, 0
      %p362 = por %p360, %p361
      %p363 = scmp.ne.s32.totalorder %s352, %s355
      %p364 = scmp.eq.s32.totalorder %s27, 3
      %p365 = por %p363, %p364
      %p366 = scmp.ne.s32.totalorder %s355, %s356
      %p367 = scmp.eq.s32.totalorder %s27, 0
      %p368 = por %p366, %p367
      %p369 = scmp.ne.s32.totalorder %s355, %s356
      %p370 = scmp.eq.s32.totalorder %s28, 3
      %p371 = por %p369, %p370
      %p373 = scmp.ne.s32.totalorder %s356, %s372
      %p374 = scmp.eq.s32.totalorder %s28, 0
      %p375 = por %p373, %p374
      %p376 = scmp.le.s32.totalorder 1, %s22
      %p377 = scmp.lt.s32.totalorder %s22, 5
      %p378 = pnand %p376, %p377
      %p379 = pneg %p378
      // Predicated region
      $region9: #{tpu_custom_call.1} parent=5 // pred_check
        _
      $region10: #{tpu_custom_call.1} parent=5 // pred_check_branch
        %381 = sbr.rel (%p378) target = $region12
      $region11: #{tpu_custom_call.1} parent=5 // pred_region
        %s382 = ssub.s32 %s22, 1
        // Predicated region
        $region13: #{tpu_custom_call.1} parent=11 // pred_check
          %p383 = pneg %p81
        $region14: #{tpu_custom_call.1} parent=11 // pred_check_branch
          %385 = sbr.rel (%p383) target = $region16
        $region15: #{tpu_custom_call.1} parent=11 // pred_region
          _
        $region16: #{tpu_custom_call.1} parent=11 // pred_fallthru
          _
        // Predicated region
        $region17: #{tpu_custom_call.1} parent=11 // pred_check
          %p386 = pneg %p102
        $region18: #{tpu_custom_call.1} parent=11 // pred_check_branch
          %388 = sbr.rel (%p386) target = $region20
        $region19: #{tpu_custom_call.1} parent=11 // pred_region
          _
        $region20: #{tpu_custom_call.1} parent=11 // pred_fallthru
          _
        // Predicated region
        $region21: #{tpu_custom_call.1} parent=11 // pred_check
          %p389 = pneg %p123
        $region22: #{tpu_custom_call.1} parent=11 // pred_check_branch
          %391 = sbr.rel (%p389) target = $region24
        $region23: #{tpu_custom_call.1} parent=11 // pred_region
          _
        $region24: #{tpu_custom_call.1} parent=11 // pred_fallthru
          _
        // Predicated region
        $region25: #{tpu_custom_call.1} parent=11 // pred_check
          %p392 = pneg %p144
        $region26: #{tpu_custom_call.1} parent=11 // pred_check_branch
          %394 = sbr.rel (%p392) target = $region28
        $region27: #{tpu_custom_call.1} parent=11 // pred_region
          _
        $region28: #{tpu_custom_call.1} parent=11 // pred_fallthru
          _
        // Predicated region
        $region29: #{tpu_custom_call.1} parent=11 // pred_check
          %p395 = pneg %p321
        $region30: #{tpu_custom_call.1} parent=11 // pred_check_branch
          %397 = sbr.rel (%p395) target = $region32
        $region31: #{tpu_custom_call.1} parent=11 // pred_region
          _
        $region32: #{tpu_custom_call.1} parent=11 // pred_fallthru
          _
        // Predicated region
        $region33: #{tpu_custom_call.1} parent=11 // pred_check
          %p398 = pneg %p342
        $region34: #{tpu_custom_call.1} parent=11 // pred_check_branch
          %400 = sbr.rel (%p398) target = $region36
        $region35: #{tpu_custom_call.1} parent=11 // pred_region
          _
        $region36: #{tpu_custom_call.1} parent=11 // pred_fallthru
          _
      $region12: #{tpu_custom_call.1} parent=5 // pred_fallthru
        _
      %p401 = scmp.lt.s32.totalorder %s22, 4
      // Predicated region
      $region37: #{tpu_custom_call.1} parent=5 // pred_check
        %p402 = pneg %p401
      $region38: #{tpu_custom_call.1} parent=5 // pred_check_branch
        %404 = sbr.rel (%p402) target = $region40
      $region39: #{tpu_custom_call.1} parent=5 // pred_region
        // Predicated region
        $region41: #{tpu_custom_call.1} parent=39 // pred_check
          %p405 = pneg %p54
        $region42: #{tpu_custom_call.1} parent=39 // pred_check_branch
          %407 = sbr.rel (%p405) target = $region44
        $region43: #{tpu_custom_call.1} parent=39 // pred_region
          %p408 = scmp.lt.s32.totalorder %s29, 1
          %s409 = scalar_select %p408, %s29, 1
          %s410 = smul.addr %s409, 4
          %s411 = scalar_lea.vmem %s0, %s410
        $region44: #{tpu_custom_call.1} parent=39 // pred_fallthru
          _
        // Predicated region
        $region45: #{tpu_custom_call.1} parent=39 // pred_check
          %p412 = pneg %p164
        $region46: #{tpu_custom_call.1} parent=39 // pred_check_branch
          %414 = sbr.rel (%p412) target = $region48
        $region47: #{tpu_custom_call.1} parent=39 // pred_region
          %p415 = scmp.lt.s32.totalorder %s30, 1
          %s416 = scalar_select %p415, %s30, 1
          %s417 = smul.addr %s416, 8
          %s418 = scalar_lea.vmem %s5, %s417
        $region48: #{tpu_custom_call.1} parent=39 // pred_fallthru
          _
        // Predicated region
        $region49: #{tpu_custom_call.1} parent=39 // pred_check
          %p419 = pneg %p190
        $region50: #{tpu_custom_call.1} parent=39 // pred_check_branch
          %421 = sbr.rel (%p419) target = $region52
        $region51: #{tpu_custom_call.1} parent=39 // pred_region
          %p422 = scmp.lt.s32.totalorder %s30, 1
          %s423 = scalar_select %p422, %s30, 1
          %s424 = scalar_lea.vmem %s6, %s423
        $region52: #{tpu_custom_call.1} parent=39 // pred_fallthru
          _
        // Predicated region
        $region53: #{tpu_custom_call.1} parent=39 // pred_check
          %p425 = pneg %p216
        $region54: #{tpu_custom_call.1} parent=39 // pred_check_branch
          %427 = sbr.rel (%p425) target = $region56
        $region55: #{tpu_custom_call.1} parent=39 // pred_region
          %p428 = scmp.lt.s32.totalorder %s30, 1
          %s429 = scalar_select %p428, %s30, 1
          %s430 = smul.addr %s429, 4
          %s431 = smul.addr %s430, 4
          %s432 = scalar_lea.vmem %s7, %s431
        $region56: #{tpu_custom_call.1} parent=39 // pred_fallthru
          _
        // Predicated region
        $region57: #{tpu_custom_call.1} parent=39 // pred_check
          %p433 = pneg %p242
        $region58: #{tpu_custom_call.1} parent=39 // pred_check_branch
          %435 = sbr.rel (%p433) target = $region60
        $region59: #{tpu_custom_call.1} parent=39 // pred_region
          %p436 = scmp.lt.s32.totalorder %s30, 1
          %s437 = scalar_select %p436, %s30, 1
          %s438 = scalar_lea.vmem %s8, %s437
        $region60: #{tpu_custom_call.1} parent=39 // pred_fallthru
          _
        // Predicated region
        $region61: #{tpu_custom_call.1} parent=39 // pred_check
          %p439 = pneg %p268
        $region62: #{tpu_custom_call.1} parent=39 // pred_check_branch
          %441 = sbr.rel (%p439) target = $region64
        $region63: #{tpu_custom_call.1} parent=39 // pred_region
          %p442 = scmp.lt.s32.totalorder %s30, 1
          %s443 = scalar_select %p442, %s30, 1
          %s444 = smul.addr %s443, 8
          %s445 = smul.addr %s444, 4
          %s446 = scalar_lea.vmem %s9, %s445
        $region64: #{tpu_custom_call.1} parent=39 // pred_fallthru
          _
        // Predicated region
        $region65: #{tpu_custom_call.1} parent=39 // pred_check
          %p447 = pneg %p294
        $region66: #{tpu_custom_call.1} parent=39 // pred_check_branch
          %449 = sbr.rel (%p447) target = $region68
        $region67: #{tpu_custom_call.1} parent=39 // pred_region
          %p450 = scmp.lt.s32.totalorder %s30, 1
          %s451 = scalar_select %p450, %s30, 1
          %s452 = scalar_lea.vmem %s10, %s451
        $region68: #{tpu_custom_call.1} parent=39 // pred_fallthru
          _
      $region40: #{tpu_custom_call.1} parent=5 // pred_fallthru
        _
      %p453 = scmp.le.s32.totalorder 1, %s22
      %p454 = scmp.lt.s32.totalorder %s22, 5
      %p455 = pnand %p453, %p454
      %p456 = pneg %p455
      // Predicated region
      $region69: #{tpu_custom_call.1} parent=5 // pred_check
        _
      $region70: #{tpu_custom_call.1} parent=5 // pred_check_branch
        %458 = sbr.rel (%p455) target = $region72
      $region71: #{tpu_custom_call.1} parent=5 // pred_region
        %s459 = ssub.s32 %s22, 1
        %p460 = scmp.lt.s32.totalorder %s31, 1
        %s461 = scalar_select %p460, %s31, 1
        %s462 = smul.addr %s461, 4
        %s463 = scalar_lea.vmem %s0, %s462
        %p464 = pneg %p60
        %p465 = pneg %p57
        %p466 = pneg %p81
        %p467 = pneg %p78
        %p468 = pneg %p102
        %p469 = pneg %p99
        %p470 = pneg %p123
        %p471 = pneg %p120
        %p472 = pneg %p144
        %p473 = pneg %p141
        %p474 = scmp.lt.s32.totalorder %s32, 1
        %s475 = scalar_select %p474, %s32, 1
        %s476 = smul.addr %s475, 8
        %s477 = scalar_lea.vmem %s5, %s476
        %p478 = pneg %p170
        %p479 = pneg %p167
        %p480 = scmp.lt.s32.totalorder %s32, 1
        %s481 = scalar_select %p480, %s32, 1
        %s482 = scalar_lea.vmem %s6, %s481
        %p483 = pneg %p196
        %p484 = pneg %p193
        %p485 = scmp.lt.s32.totalorder %s32, 1
        %s486 = scalar_select %p485, %s32, 1
        %s487 = smul.addr %s486, 4
        %s488 = smul.addr %s487, 4
        %s489 = scalar_lea.vmem %s7, %s488
        %p490 = pneg %p222
        %p491 = pneg %p219
        %p492 = scmp.lt.s32.totalorder %s32, 1
        %s493 = scalar_select %p492, %s32, 1
        %s494 = scalar_lea.vmem %s8, %s493
        %p495 = pneg %p248
        %p496 = pneg %p245
        %p497 = scmp.lt.s32.totalorder %s32, 1
        %s498 = scalar_select %p497, %s32, 1
        %s499 = smul.addr %s498, 8
        %s500 = smul.addr %s499, 4
        %s501 = scalar_lea.vmem %s9, %s500
        %p502 = pneg %p274
        %p503 = pneg %p271
        %p504 = scmp.lt.s32.totalorder %s32, 1
        %s505 = scalar_select %p504, %s32, 1
        %s506 = scalar_lea.vmem %s10, %s505
        %p507 = pneg %p300
        %p508 = pneg %p297
        %p509 = pneg %p321
        %p510 = pneg %p318
        %p511 = pneg %p342
        %p512 = pneg %p339
        %p513 = pneg %p368
        %p514 = pneg %p365
        %s515 = sand.u32 %s355, 1
        %s516 = scalar_lea.sflag [#allocation5], %s515
        %s517 = sand.u32 %s355, 1
        %s518 = smul.addr %s517, 8
        %s519 = scalar_lea.vmem [#allocation4], %s518
        %p520 = scmp.lt.s32.totalorder %s31, 1
        %s521 = scalar_select %p520, %s31, 1
        %s522 = smul.addr %s521, 4
        %s523 = scalar_lea.vmem %s0, %s522
        %p524 = scmp.lt.s32.totalorder %s32, 1
        %s525 = scalar_select %p524, %s32, 1
        %s526 = smul.addr %s525, 8
        %s527 = scalar_lea.vmem %s5, %s526
        %p528 = scmp.lt.s32.totalorder %s32, 1
        %s529 = scalar_select %p528, %s32, 1
        %s530 = scalar_lea.vmem %s6, %s529
        %p531 = scmp.lt.s32.totalorder %s32, 1
        %s532 = scalar_select %p531, %s32, 1
        %s533 = smul.addr %s532, 4
        %s534 = smul.addr %s533, 4
        %s535 = scalar_lea.vmem %s7, %s534
        %p536 = scmp.lt.s32.totalorder %s32, 1
        %s537 = scalar_select %p536, %s32, 1
        %s538 = scalar_lea.vmem %s8, %s537
        %p539 = scmp.lt.s32.totalorder %s32, 1
        %s540 = scalar_select %p539, %s32, 1
        %s541 = smul.addr %s540, 8
        %s542 = smul.addr %s541, 4
        %s543 = scalar_lea.vmem %s9, %s542
        %p544 = scmp.lt.s32.totalorder %s32, 1
        %s545 = scalar_select %p544, %s32, 1
        %s546 = scalar_lea.vmem %s10, %s545
        %p548 = scmp.eq.s32.totalorder %s32, 0
        // Predicated region
        $region73: #{tpu_custom_call.1} parent=71 // pred_check
          %p549 = pneg %p548
        $region74: #{tpu_custom_call.1} parent=71 // pred_check_branch
          %551 = sbr.rel (%p549) target = $region76
        $region75: #{tpu_custom_call.1} parent=71 // pred_region
          %v552 = vld [vmem:[%s523] sm:$0xf]
          %v553 = vld [vmem:[%s1] sm:$0xf]
          %v554 = vld [vmem:[%s1 + $0x4] sm:$0xf]
          %v555 = vld [vmem:[%s1 + $0x8] sm:$0xf]
          %v556 = vld [vmem:[%s1 + $0xc] sm:$0x3]
          %v557 = vld [vmem:[%s2] sm:$0x1]
          %v559 = vlaneseq
          %v560 = vshrl.u32 %v559, 7
          %v561 = vsub.s32 0, %v560
          %v562 = vrot.slane %v557, %v561
          %v568 = vunpack.c.l.b16 %v553
          %v569 = vunpack.c.l.b16 %v554
          %v570 = vunpack.c.l.b16 %v555
          %v571 = vunpack.c.l.b16 %v556
          %v572 = vpack.c.b16 %v569, %v568
          %v573 = vpack.c.b16 %v571, %v570
          %vm575 = vcmask 228352
          %v577 = vsel %vm575, %v552, 0
          %vm579 = vcmask 1045504
          %v581 = vsel %vm579, %v573, 0
          %583 = vmatprep.subr.bf16.mxu0 0
          %584 = vmatpush1.bf16.msra.mxu0 0
          %585 = vmatprep.subr.bf16.mxu0 0
          %586 = vmatpush1.bf16.msra.mxu0 0
          %587 = vmatprep.subr.bf16.mxu0 0
          %588 = vmatpush1.bf16.msra.mxu0 0
          %589 = vmatprep.subr.bf16.mxu0 0
          %590 = vmatpush1.bf16.msra.mxu0 0
          %591 = vmatprep.subr.bf16.mxu0 0
          %592 = vmatpush1.bf16.msra.mxu0 0
          %593 = vmatprep.subr.bf16.mxu0 0
          %594 = vmatpush1.bf16.msra.mxu0 0
          %595 = vmatprep.subr.bf16.mxu0 0
          %596 = vmatpush1.bf16.msra.mxu0 %v581
          %597 = vmatprep.subr.bf16.mxu0 0
          %598 = vmatpush1.bf16.msra.mxu0 %v572
          %599 = vmatprep.subr.bf16.mxu0 0
          %600 = vmatpush2.bf16.msra.mxu0 0
          %601 = vmatprep.subr.bf16.mxu0 0
          %602 = vmatpush2.bf16.msra.mxu0 0
          %603 = vmatprep.subr.bf16.mxu0 0
          %604 = vmatpush2.bf16.msra.mxu0 0
          %605 = vmatprep.subr.bf16.mxu0 0
          %606 = vmatpush2.bf16.msra.mxu0 0
          %607 = vmatprep.subr.bf16.mxu0 0
          %608 = vmatpush2.bf16.msra.mxu0 0
          %609 = vmatprep.subr.bf16.mxu0 0
          %610 = vmatpush2.bf16.msra.mxu0 0
          %611 = vmatprep.subr.bf16.mxu0 0
          %612 = vmatpush2.bf16.msra.mxu0 0
          %613 = vmatprep.subr.bf16.mxu0 0
          %614 = vmatpush2.bf16.msra.mxu0 0
          %615 = vmatprep.mubr.bf16.mxu0 0
          %616 = vmatmul.mubr.bf16.gmra.mxu0 %v577
          %v617 = vpop.f32.mrf.mxu0
          %v618 = vadd.f32 %v562, %v617
          %v619 = vpop.f32.mrf.mxu0
          %v620 = vpop.f32.mrf.mxu0
          %v621 = vpop.f32.mrf.mxu0
          %622 = vdwg.mxu0
          %v623 = vld [vmem:[%s3] sm:$0x1]
          %v624 = vld [vmem:[%s4] sm:$0x1]
          %vm625 = vcmask 261120
          %v626 = vsel %vm625, %v618, 0.0
          %627 = vadd.xlane.f32.xlu0 %v626
          %v628 = vpop.xlane.xlu0 %627
          %v629 = vrcp.pop 32.0
          %v630 = vmul.f32 %v628, %v629
          %v631 = vsub.f32 %v618, %v630
          %v632 = vmul.f32 %v631, %v631
          %v633 = vsel %vm625, %v632, 0.0
          %634 = vadd.xlane.f32.xlu0 %v633
          %v635 = vpop.xlane.xlu0 %634
          %v636 = vmul.f32 %v635, %v629
          %v637 = vadd.f32 %v636, 1e-05
          %v638 = vrsqrt.pop %v637
          %v639 = vmul.f32 %v631, %v638
          %v641 = vlaneseq
          %v642 = vshrl.u32 %v641, 7
          %v643 = vsub.s32 0, %v642
          %v644 = vrot.slane %v623, %v643
          %v646 = vmul.f32 %v639, %v644
          %v648 = vlaneseq
          %v649 = vshrl.u32 %v648, 7
          %v650 = vsub.s32 0, %v649
          %v651 = vrot.slane %v624, %v650
          %v653 = vadd.f32 %v646, %v651
          %654 = vst.msk [vmem:[#allocation2] sm:$0xff] %vm625, %v653
        $region76: #{tpu_custom_call.1} parent=71 // pred_fallthru
          _
        %v655 = vld [vmem:[#allocation2] sm:$0xff]
        %v656 = vld [vmem:[%s527] sm:$0x7f]
        %v657 = vlaneseq
        %v658 = vshrl.u32 %v657, 7
        %v659 = vlaneseq
        %v660 = vshrl.u32 %v659, 7
        %v661 = vsub.s32 3, %v660
        %v662 = vrot.slane %v656, %v661
        %v663 = vmul.f32 %v655, %v662
        %v664 = vrot.slane %v655, 5
        %vm665 = vcmp.ge.s32.totalorder %v658, 3
        %vm666 = vcmp.lt.s32.totalorder %v658, 11
        %vm667 = vmand %vm665, %vm666
        %v668 = vsel %vm667, 1, 0
        %vm669 = vcmp.eq.s32.totalorder %v668, 1
        %v670 = vsel %vm669, %v664, 0.0
        %v671 = vlaneseq
        %v672 = vshrl.u32 %v671, 7
        %v673 = vsub.s32 0, %v672
        %v674 = vrot.slane %v656, %v673
        %v675 = vmul.f32 %v670, %v674
        %v676 = vadd.f32 %v663, %v675
        %v677 = vrot.slane %v655, 6
        %vm678 = vcmp.ge.s32.totalorder %v658, 2
        %vm679 = vcmp.lt.s32.totalorder %v658, 10
        %vm680 = vmand %vm678, %vm679
        %v681 = vsel %vm680, 1, 0
        %vm682 = vcmp.eq.s32.totalorder %v681, 1
        %v683 = vsel %vm682, %v677, 0.0
        %v684 = vlaneseq
        %v685 = vshrl.u32 %v684, 7
        %v686 = vsub.s32 1, %v685
        %v687 = vrot.slane %v656, %v686
        %v688 = vmul.f32 %v683, %v687
        %v689 = vadd.f32 %v676, %v688
        %v690 = vrot.slane %v655, 7
        %vm691 = vcmp.ge.s32.totalorder %v658, 1
        %vm692 = vcmp.lt.s32.totalorder %v658, 9
        %vm693 = vmand %vm691, %vm692
        %v694 = vsel %vm693, 1, 0
        %vm695 = vcmp.eq.s32.totalorder %v694, 1
        %v696 = vsel %vm695, %v690, 0.0
        %v697 = vlaneseq
        %v698 = vshrl.u32 %v697, 7
        %v699 = vsub.s32 2, %v698
        %v700 = vrot.slane %v656, %v699
        %v701 = vmul.f32 %v696, %v700
        %v702 = vadd.f32 %v689, %v701
        %v703 = vrot.slane %v655, 1
        %vm704 = vcmp.ge.s32.totalorder %v658, 4294967295
        %vm705 = vcmp.lt.s32.totalorder %v658, 7
        %vm706 = vmand %vm704, %vm705
        %v707 = vsel %vm706, 1, 0
        %vm708 = vcmp.eq.s32.totalorder %v707, 1
        %v709 = vsel %vm708, %v703, 0.0
        %v710 = vlaneseq
        %v711 = vshrl.u32 %v710, 7
        %v712 = vsub.s32 4, %v711
        %v713 = vrot.slane %v656, %v712
        %v714 = vmul.f32 %v709, %v713
        %v715 = vadd.f32 %v702, %v714
        %v716 = vrot.slane %v655, 2
        %vm717 = vcmp.ge.s32.totalorder %v658, 4294967294
        %vm718 = vcmp.lt.s32.totalorder %v658, 6
        %vm719 = vmand %vm717, %vm718
        %v720 = vsel %vm719, 1, 0
        %vm721 = vcmp.eq.s32.totalorder %v720, 1
        %v722 = vsel %vm721, %v716, 0.0
        %v723 = vlaneseq
        %v724 = vshrl.u32 %v723, 7
        %v725 = vsub.s32 5, %v724
        %v726 = vrot.slane %v656, %v725
        %v727 = vmul.f32 %v722, %v726
        %v728 = vadd.f32 %v715, %v727
        %v729 = vrot.slane %v655, 3
        %vm730 = vcmp.ge.s32.totalorder %v658, 4294967293
        %vm731 = vcmp.lt.s32.totalorder %v658, 5
        %vm732 = vmand %vm730, %vm731
        %v733 = vsel %vm732, 1, 0
        %vm734 = vcmp.eq.s32.totalorder %v733, 1
        %v735 = vsel %vm734, %v729, 0.0
        %v736 = vlaneseq
        %v737 = vshrl.u32 %v736, 7
        %v738 = vsub.s32 6, %v737
        %v739 = vrot.slane %v656, %v738
        %v740 = vmul.f32 %v735, %v739
        %v741 = vadd.f32 %v728, %v740
        %v742 = vld [vmem:[%s530] sm:$0x1]
        %v744 = vlaneseq
        %v745 = vshrl.u32 %v744, 7
        %v746 = vsub.s32 0, %v745
        %v747 = vrot.slane %v742, %v746
        %v749 = vadd.f32 %v741, %v747
        %vm750 = vcmask 261120
        %v751 = vsel %vm750, %v749, 0.0
        %752 = vadd.xlane.f32.xlu0 %v751
        %v753 = vpop.xlane.xlu0 %752
        %v754 = vrcp.pop 32.0
        %v755 = vmul.f32 %v753, %v754
        %v756 = vsub.f32 %v749, %v755
        %v757 = vmul.f32 %v756, %v756
        %v758 = vsel %vm750, %v757, 0.0
        %759 = vadd.xlane.f32.xlu0 %v758
        %v760 = vpop.xlane.xlu0 %759
        %v761 = vmul.f32 %v760, %v754
        %v762 = vadd.f32 %v761, 1e-05
        %v763 = vrsqrt.pop %v762
        %v764 = vmul.f32 %v756, %v763
        %765 = vst.msk [vmem:[#allocation3] sm:$0xff] %vm750, %v764
        %v766 = vld [vmem:[#allocation3] sm:$0xff]
        %v767 = vpack.c.bf16 %v766, %v766
        %v768 = vld [vmem:[%s535] sm:$0xf]
        %v769 = vld [vmem:[%s535 + $0x4] sm:$0xf]
        %v770 = vld [vmem:[%s535 + $0x8] sm:$0xf]
        %v771 = vld [vmem:[%s535 + $0xc] sm:$0xf]
        %v772 = vld [vmem:[%s538] sm:$0x1]
        %v774 = vlaneseq
        %v775 = vshrl.u32 %v774, 7
        %v776 = vsub.s32 0, %v775
        %v777 = vrot.slane %v772, %v776
        %v783 = vunpack.c.l.b16 %v768
        %v784 = vunpack.c.l.b16 %v769
        %v785 = vunpack.c.l.b16 %v770
        %v786 = vunpack.c.l.b16 %v771
        %v787 = vpack.c.b16 %v784, %v783
        %v788 = vpack.c.b16 %v786, %v785
        %v792 = vsel %vm750, %v767, 0
        %794 = vmatprep.subr.bf16.mxu0 0
        %795 = vmatpush1.bf16.msra.mxu0 0
        %796 = vmatprep.subr.bf16.mxu0 0
        %797 = vmatpush1.bf16.msra.mxu0 0
        %798 = vmatprep.subr.bf16.mxu0 0
        %799 = vmatpush1.bf16.msra.mxu0 0
        %800 = vmatprep.subr.bf16.mxu0 0
        %801 = vmatpush1.bf16.msra.mxu0 0
        %802 = vmatprep.subr.bf16.mxu0 0
        %803 = vmatpush1.bf16.msra.mxu0 0
        %804 = vmatprep.subr.bf16.mxu0 0
        %805 = vmatpush1.bf16.msra.mxu0 0
        %806 = vmatprep.subr.bf16.mxu0 0
        %807 = vmatpush1.bf16.msra.mxu0 %v788
        %808 = vmatprep.subr.bf16.mxu0 0
        %809 = vmatpush1.bf16.msra.mxu0 %v787
        %810 = vmatprep.subr.bf16.mxu0 0
        %811 = vmatpush2.bf16.msra.mxu0 0
        %812 = vmatprep.subr.bf16.mxu0 0
        %813 = vmatpush2.bf16.msra.mxu0 0
        %814 = vmatprep.subr.bf16.mxu0 0
        %815 = vmatpush2.bf16.msra.mxu0 0
        %816 = vmatprep.subr.bf16.mxu0 0
        %817 = vmatpush2.bf16.msra.mxu0 0
        %818 = vmatprep.subr.bf16.mxu0 0
        %819 = vmatpush2.bf16.msra.mxu0 0
        %820 = vmatprep.subr.bf16.mxu0 0
        %821 = vmatpush2.bf16.msra.mxu0 0
        %822 = vmatprep.subr.bf16.mxu0 0
        %823 = vmatpush2.bf16.msra.mxu0 0
        %824 = vmatprep.subr.bf16.mxu0 0
        %825 = vmatpush2.bf16.msra.mxu0 0
        %826 = vmatprep.mubr.bf16.mxu0 0
        %827 = vmatmul.mubr.bf16.gmra.mxu0 %v792
        %v828 = vpop.f32.mrf.mxu0
        %v829 = vadd.f32 %v777, %v828
        %v830 = vpop.f32.mrf.mxu0
        %v831 = vpop.f32.mrf.mxu0
        %v832 = vpop.f32.mrf.mxu0
        %833 = vdwg.mxu0
        %v834 = vmul.f32 %v829, 0.5
        %v835 = vmul.f32 %v829, 0.044715
        %v836 = vmul.f32 %v835, %v829
        %v837 = vmul.f32 %v836, %v829
        %v838 = vadd.f32 %v829, %v837
        %v839 = vmul.f32 %v838, 0.7978846
        %v840 = vtanh.pop %v839
        %v841 = vadd.f32 %v840, 1.0
        %v842 = vmul.f32 %v834, %v841
        %v843 = vpack.c.bf16 %v842, %v842
        %v844 = vld [vmem:[%s543] sm:$0xf]
        %v845 = vld [vmem:[%s543 + $0x4] sm:$0xf]
        %v846 = vld [vmem:[%s543 + $0x8] sm:$0xf]
        %v847 = vld [vmem:[%s543 + $0xc] sm:$0xf]
        %v848 = vld [vmem:[%s543 + $0x10] sm:$0xf]
        %v849 = vld [vmem:[%s543 + $0x14] sm:$0xf]
        %v850 = vld [vmem:[%s543 + $0x18] sm:$0xf]
        %v851 = vld [vmem:[%s543 + $0x1c] sm:$0xf]
        %v852 = vld [vmem:[%s546] sm:$0x1]
        %v854 = vlaneseq
        %v855 = vshrl.u32 %v854, 7
        %v856 = vsub.s32 0, %v855
        %v857 = vrot.slane %v852, %v856
        %v867 = vunpack.c.l.b16 %v844
        %v868 = vunpack.c.l.b16 %v845
        %v869 = vunpack.c.l.b16 %v846
        %v870 = vunpack.c.l.b16 %v847
        %v871 = vunpack.c.l.b16 %v848
        %v872 = vunpack.c.l.b16 %v849
        %v873 = vunpack.c.l.b16 %v850
        %v874 = vunpack.c.l.b16 %v851
        %v875 = vpack.c.b16 %v868, %v867
        %v876 = vpack.c.b16 %v870, %v869
        %v877 = vpack.c.b16 %v872, %v871
        %v878 = vpack.c.b16 %v874, %v873
        %vm883 = vcmask 523264
        %v885 = vsel %vm883, %v843, 0
        %887 = vmatprep.subr.bf16.mxu0 0
        %888 = vmatpush1.bf16.msra.mxu0 0
        %889 = vmatprep.subr.bf16.mxu0 0
        %890 = vmatpush1.bf16.msra.mxu0 0
        %891 = vmatprep.subr.bf16.mxu0 0
        %892 = vmatpush1.bf16.msra.mxu0 0
        %893 = vmatprep.subr.bf16.mxu0 0
        %894 = vmatpush1.bf16.msra.mxu0 0
        %895 = vmatprep.subr.bf16.mxu0 0
        %896 = vmatpush1.bf16.msra.mxu0 %v878
        %897 = vmatprep.subr.bf16.mxu0 0
        %898 = vmatpush1.bf16.msra.mxu0 %v877
        %899 = vmatprep.subr.bf16.mxu0 0
        %900 = vmatpush1.bf16.msra.mxu0 %v876
        %901 = vmatprep.subr.bf16.mxu0 0
        %902 = vmatpush1.bf16.msra.mxu0 %v875
        %903 = vmatprep.subr.bf16.mxu0 0
        %904 = vmatpush2.bf16.msra.mxu0 0
        %905 = vmatprep.subr.bf16.mxu0 0
        %906 = vmatpush2.bf16.msra.mxu0 0
        %907 = vmatprep.subr.bf16.mxu0 0
        %908 = vmatpush2.bf16.msra.mxu0 0
        %909 = vmatprep.subr.bf16.mxu0 0
        %910 = vmatpush2.bf16.msra.mxu0 0
        %911 = vmatprep.subr.bf16.mxu0 0
        %912 = vmatpush2.bf16.msra.mxu0 0
        %913 = vmatprep.subr.bf16.mxu0 0
        %914 = vmatpush2.bf16.msra.mxu0 0
        %915 = vmatprep.subr.bf16.mxu0 0
        %916 = vmatpush2.bf16.msra.mxu0 0
        %917 = vmatprep.subr.bf16.mxu0 0
        %918 = vmatpush2.bf16.msra.mxu0 0
        %919 = vmatprep.mubr.bf16.mxu0 0
        %920 = vmatmul.mubr.bf16.gmra.mxu0 %v885
        %v921 = vpop.f32.mrf.mxu0
        %v922 = vadd.f32 %v857, %v921
        %v923 = vpop.f32.mrf.mxu0
        %v924 = vpop.f32.mrf.mxu0
        %v925 = vpop.f32.mrf.mxu0
        %926 = vdwg.mxu0
        %v927 = vld [vmem:[#allocation2] sm:$0xff]
        %v928 = vadd.f32 %v927, %v922
        %929 = vst.msk [vmem:[#allocation2] sm:$0xff] %vm750, %v928
        %p930 = scmp.eq.s32.totalorder %s32, 1
        // Predicated region
        $region77: #{tpu_custom_call.1} parent=71 // pred_check
          %p931 = pneg %p930
        $region78: #{tpu_custom_call.1} parent=71 // pred_check_branch
          %933 = sbr.rel (%p931) target = $region80
        $region79: #{tpu_custom_call.1} parent=71 // pred_region
          %v934 = vld [vmem:[#allocation2] sm:$0xff]
          %v935 = vsel %vm750, %v934, 0.0
          %936 = vadd.xlane.f32.xlu0 %v935
          %v937 = vpop.xlane.xlu0 %936
          %v938 = vmul.f32 %v937, %v754
          %v939 = vsub.f32 %v934, %v938
          %v940 = vmul.f32 %v939, %v939
          %v941 = vsel %vm750, %v940, 0.0
          %942 = vadd.xlane.f32.xlu0 %v941
          %v943 = vpop.xlane.xlu0 %942
          %v944 = vmul.f32 %v943, %v754
          %v945 = vadd.f32 %v944, 1e-05
          %v946 = vrsqrt.pop %v945
          %v947 = vmul.f32 %v939, %v946
          %v948 = vpack.c.bf16 %v947, %v947
          %v949 = vld [vmem:[%s11] sm:$0xf]
          %v950 = vld [vmem:[%s11 + $0x4] sm:$0xf]
          %v951 = vld [vmem:[%s11 + $0x8] sm:$0xf]
          %v952 = vld [vmem:[%s11 + $0xc] sm:$0xf]
          %v953 = vld [vmem:[%s12] sm:$0x1]
          %v955 = vlaneseq
          %v956 = vshrl.u32 %v955, 7
          %v957 = vsub.s32 0, %v956
          %v958 = vrot.slane %v953, %v957
          %v964 = vunpack.c.l.b16 %v949
          %v965 = vunpack.c.l.b16 %v950
          %v966 = vunpack.c.l.b16 %v951
          %v967 = vunpack.c.l.b16 %v952
          %v968 = vpack.c.b16 %v965, %v964
          %v969 = vpack.c.b16 %v967, %v966
          %v973 = vsel %vm750, %v948, 0
          %975 = vmatprep.subr.bf16.mxu0 0
          %976 = vmatpush1.bf16.msra.mxu0 0
          %977 = vmatprep.subr.bf16.mxu0 0
          %978 = vmatpush1.bf16.msra.mxu0 0
          %979 = vmatprep.subr.bf16.mxu0 0
          %980 = vmatpush1.bf16.msra.mxu0 0
          %981 = vmatprep.subr.bf16.mxu0 0
          %982 = vmatpush1.bf16.msra.mxu0 0
          %983 = vmatprep.subr.bf16.mxu0 0
          %984 = vmatpush1.bf16.msra.mxu0 0
          %985 = vmatprep.subr.bf16.mxu0 0
          %986 = vmatpush1.bf16.msra.mxu0 0
          %987 = vmatprep.subr.bf16.mxu0 0
          %988 = vmatpush1.bf16.msra.mxu0 %v969
          %989 = vmatprep.subr.bf16.mxu0 0
          %990 = vmatpush1.bf16.msra.mxu0 %v968
          %991 = vmatprep.subr.bf16.mxu0 0
          %992 = vmatpush2.bf16.msra.mxu0 0
          %993 = vmatprep.subr.bf16.mxu0 0
          %994 = vmatpush2.bf16.msra.mxu0 0
          %995 = vmatprep.subr.bf16.mxu0 0
          %996 = vmatpush2.bf16.msra.mxu0 0
          %997 = vmatprep.subr.bf16.mxu0 0
          %998 = vmatpush2.bf16.msra.mxu0 0
          %999 = vmatprep.subr.bf16.mxu0 0
          %1000 = vmatpush2.bf16.msra.mxu0 0
          %1001 = vmatprep.subr.bf16.mxu0 0
          %1002 = vmatpush2.bf16.msra.mxu0 0
          %1003 = vmatprep.subr.bf16.mxu0 0
          %1004 = vmatpush2.bf16.msra.mxu0 0
          %1005 = vmatprep.subr.bf16.mxu0 0
          %1006 = vmatpush2.bf16.msra.mxu0 0
          %1007 = vmatprep.mubr.bf16.mxu0 0
          %1008 = vmatmul.mubr.bf16.gmra.mxu0 %v973
          %v1009 = vpop.f32.mrf.mxu0
          %v1010 = vadd.f32 %v958, %v1009
          %v1011 = vpop.f32.mrf.mxu0
          %v1012 = vpop.f32.mrf.mxu0
          %v1013 = vpop.f32.mrf.mxu0
          %1014 = vdwg.mxu0
          %v1015 = vtanh.pop %v1010
          %1016 = vst [vmem:[%s519] sm:$0xff] %v1015
        $region80: #{tpu_custom_call.1} parent=71 // pred_fallthru
          _
        %s1017 = sand.u32 %s355, 1
        %s1018 = scalar_lea.sflag [#allocation5], %s1017
        %s1019 = sand.u32 %s355, 1
        %s1020 = smul.addr %s1019, 8
        %s1021 = scalar_lea.vmem [#allocation4], %s1020
        // Predicated region
        $region81: #{tpu_custom_call.1} parent=71 // pred_check
          %p1022 = pneg %p365
        $region82: #{tpu_custom_call.1} parent=71 // pred_check_branch
          %1024 = sbr.rel (%p1022) target = $region84
        $region83: #{tpu_custom_call.1} parent=71 // pred_region
          %s1026 = ssub.s32 128, 128
          %1027 = vsyncadd %s1018, %s1026
          %s1028 = smul.addr %s31, 128
          %s1029 = scalar_lea.hbm %s13, %s1028
          %s1031 = sshll.u32 %s1021, 4
          %s1032 = int_to_ptr.vmem [resolvable:$true] %s1031
          %1034 = dma.vmem_to_hbm [thread:$0]  %s1032, 128, %s1029, %s1018
        $region84: #{tpu_custom_call.1} parent=71 // pred_fallthru
          _
      $region72: #{tpu_custom_call.1} parent=5 // pred_fallthru
        _
      %p1035 = scmp.le.s32.totalorder 2, %s22
      // Predicated region
      $region85: #{tpu_custom_call.1} parent=5 // pred_check
        %p1036 = pneg %p1035
      $region86: #{tpu_custom_call.1} parent=5 // pred_check_branch
        %1038 = sbr.rel (%p1036) target = $region88
      $region87: #{tpu_custom_call.1} parent=5 // pred_region
        %s1039 = ssub.s32 %s22, 2
        // Predicated region
        $region89: #{tpu_custom_call.1} parent=87 // pred_check
          %p1040 = pneg %p371
        $region90: #{tpu_custom_call.1} parent=87 // pred_check_branch
          %1042 = sbr.rel (%p1040) target = $region92
        $region91: #{tpu_custom_call.1} parent=87 // pred_region
          %s1043 = sand.u32 %s356, 1
          %s1044 = scalar_lea.sflag [#allocation5], %s1043
          %s1045 = sand.u32 %s356, 1
          %s1046 = smul.addr %s1045, 8
          %s1047 = scalar_lea.vmem [#allocation4], %s1046
          %1048 = dma.done %s1044, 128
        $region92: #{tpu_custom_call.1} parent=87 // pred_fallthru
          _
      $region88: #{tpu_custom_call.1} parent=5 // pred_fallthru
        _
    $region6: #{tpu_custom_call.1} parent=1 // loop_footer
      %s26 = sadd.s32 1, %s22
    $region7: #{tpu_custom_call.1} parent=1 // loop_footer_branch
      %21 = sbr.rel target = $region3
    $region8: #{tpu_custom_call.1} parent=1 // loop_exit
      _
    %1049 = vsyncpa [#allocation5], 1
    %s1050 = scalar_lea.sflag [#allocation5], 1
    %1051 = vsyncpa %s1050, 1

</llo_original>
